<compile_context>
chip_gen: v7x
topology: tpu7x:2x2x1
jax: 0.10.0
libtpu: 0.0.40
codegen_flags: <defaults>
</compile_context>

<pallas_src>
import functools

import jax
import jax.numpy as jnp
from jax.experimental import pallas as pl
from jax.experimental.pallas import tpu as pltpu

_VMEM = pl.BlockSpec(memory_space=pltpu.MemorySpace.VMEM)
_BN_EPS = 1e-5


# ---------------- in-kernel math helpers ----------------
def _erf(x):
    # Abramowitz & Stegun 7.1.26 rational approximation (|err| < 1.5e-7).
    # The divide is an approximate reciprocal -> EUP slot instead of VALU.
    p = 0.3275911
    a1, a2, a3, a4, a5 = (0.254829592, -0.284496736, 1.421413741,
                          -1.453152027, 1.061405429)
    ax = jnp.abs(x)
    t = pl.reciprocal(1.0 + p * ax, approx=True)
    poly = ((((a5 * t + a4) * t + a3) * t + a2) * t + a1) * t
    y = 1.0 - poly * jnp.exp(-ax * ax)
    return jnp.where(x >= 0, y, -y)


def _gelu(x):  # exact (erf-based) GELU, matching nn.GELU() default
    return 0.5 * x * (1.0 + _erf(x * 0.7071067811865476))


def _sigmoid(x):
    # tanh form: transcendental goes to EUP and the result stays in [0, 1].
    return 0.5 * (jnp.tanh(0.5 * x) + 1.0)


def _bn_over_rows(y, g, b, eps):
    # BatchNorm1d (train mode) on (N, F): normalize each feature over the batch axis.
    mu = jnp.mean(y, axis=0, keepdims=True)
    var = jnp.mean(jnp.square(y - mu), axis=0, keepdims=True)  # biased variance
    return (y - mu) * jax.lax.rsqrt(var + eps) * g + b


def _bn_over_lanes(y, g, b, eps):
    # BatchNorm2d (train mode) on channel-major (C, N*H*W): reduce over the lane axis.
    mu = jnp.mean(y, axis=1, keepdims=True)
    var = jnp.mean(jnp.square(y - mu), axis=1, keepdims=True)  # biased variance
    return (y - mu) * jax.lax.rsqrt(var + eps) * g + b


# ---------------- Pallas kernels ----------------
def _fc_stack_kernel(x_ref, w1_ref, b1_ref, g1_ref, be1_ref,
                     w2_ref, b2_ref, g2_ref, be2_ref, o_ref, *, eps):
    # Linear -> GELU -> BN1d -> Linear -> GELU -> BN1d, all VMEM-resident.
    h = _gelu(jnp.dot(x_ref[...], w1_ref[...],
                      preferred_element_type=jnp.float32) + b1_ref[...])
    h = _bn_over_rows(h, g1_ref[...], be1_ref[...], eps)
    h = _gelu(jnp.dot(h, w2_ref[...],
                      preferred_element_type=jnp.float32) + b2_ref[...])
    h = _bn_over_rows(h, g2_ref[...], be2_ref[...], eps)
    o_ref[...] = h.astype(o_ref.dtype)


def _convT_gelu_bn_kernel(p_ref, w_ref, b_ref, g_ref, be_ref, o_ref, *, eps):
    # (Cout, k*k*Cin) @ (k*k*Cin, N*Ho*Wo): spatial dim on MXU columns / lanes.
    y = jnp.dot(w_ref[...], p_ref[...],
                preferred_element_type=jnp.float32) + b_ref[...]
    y = _gelu(y)
    o_ref[...] = _bn_over_lanes(y, g_ref[...], be_ref[...], eps).astype(o_ref.dtype)


def _convT_sigmoid_kernel(p_ref, w_ref, b_ref, o_ref):
    y = jnp.dot(w_ref[...], p_ref[...],
                preferred_element_type=jnp.float32) + b_ref[...]
    o_ref[...] = _sigmoid(y).astype(o_ref.dtype)


# ---------------- pallas_call wrappers (whole-array single block; all data << VMEM) ----
def fc_stack(x, w1, b1, g1, be1, w2, b2, g2, be2):
    n, f_out = x.shape[0], w2.shape[1]
    return pl.pallas_call(
        functools.partial(_fc_stack_kernel, eps=_BN_EPS),
        out_shape=jax.ShapeDtypeStruct((n, f_out), jnp.float32),
        in_specs=[_VMEM] * 9, out_specs=_VMEM,
    )(x, w1, b1, g1, be1, w2, b2, g2, be2)


def convT_gelu_bn(patchesT, w_flat, b, g, be):
    cout, m = w_flat.shape[0], patchesT.shape[1]
    return pl.pallas_call(
        functools.partial(_convT_gelu_bn_kernel, eps=_BN_EPS),
        out_shape=jax.ShapeDtypeStruct((cout, m), jnp.float32),
        in_specs=[_VMEM] * 5, out_specs=_VMEM,
    )(patchesT, w_flat, b, g, be)


def convT_sigmoid(patchesT, w_flat, b):
    cout, m = w_flat.shape[0], patchesT.shape[1]
    return pl.pallas_call(
        _convT_sigmoid_kernel,
        out_shape=jax.ShapeDtypeStruct((cout, m), jnp.float32),
        in_specs=[_VMEM] * 3, out_specs=_VMEM,
    )(patchesT, w_flat, b)


# ---------------- conv-transpose glue (jitted XLA: dilate + pad + im2col^T) ----------------
# TODO(synk): the (Cin,N,Ho,Wo)->(Cin,N*Ho*Wo) patch flattening is kept in jitted XLA
# (not in-kernel) because Mosaic reshapes across lane tiles of these odd shapes are fragile;
# the extra patch traffic is <0.7 MB per forward.
def _dilate_pad_cnhw(x, stride, pad):
    c, n, h, w = x.shape
    if stride > 1:
        hd, wd = (h - 1) * stride + 1, (w - 1) * stride + 1
        x = jnp.zeros((c, n, hd, wd), x.dtype).at[:, :, ::stride, ::stride].set(x)
    if pad > 0:
        x = jnp.pad(x, ((0, 0), (0, 0), (pad, pad), (pad, pad)))
    return x


def _im2col_T(x, k):
    # x: (Cin, N, Hp, Wp) -> (k*k*Cin, N*Ho*Wo); row index = (kh*k + kw)*Cin + ci.
    cin, n, hp, wp = x.shape
    ho, wo = hp - k + 1, wp - k + 1
    slabs = [x[:, :, kh:kh + ho, kw:kw + wo].reshape(cin, n * ho * wo)
             for kh in range(k) for kw in range(k)]
    return jnp.concatenate(slabs, axis=0), (n, ho, wo)


def _prepare_conv_weight(w_t):
    # PyTorch ConvTranspose2d weight (Cin, Cout, kH, kW) -> flat correlation weight
    # (Cout, k*k*Cin): w_flat[co, (kh*k+kw)*Cin+ci] = w_t[ci, co, k-1-kh, k-1-kw].
    cin, cout, k, _ = w_t.shape
    w = jnp.transpose(w_t[:, :, ::-1, ::-1], (1, 2, 3, 0))  # (Cout, k, k, Cin)
    return w.reshape(cout, k * k * cin)


def prepare_params(raw):
    """Hoist conv-weight flip/flatten out of the per-forward path (run once)."""
    p = dict(raw)
    for name in ("ct1", "ct2", "ct3"):
        p[name + "_w"] = _prepare_conv_weight(raw[name + "_w"])
    return p


# ---------------- Net3 forward ----------------
def net3_forward(p, x, *, capacity, cnn_kwargs):
    k0, k1, s2 = cnn_kwargs
    c4 = capacity * 4
    n = x.shape[0]

    # Linear -> GELU -> BN1d -> Linear -> GELU -> BN1d (one fused kernel)
    h = fc_stack(x, p["w1"], p["b1"], p["bn1_g"], p["bn1_b"],
                 p["w2"], p["b2"], p["bn2_g"], p["bn2_b"])        # (N, c4*s2*s2)

    # Lin_View + switch to channel-major (C, N, H, W) so spatial is lane-dense downstream
    h = h.reshape(n, c4, s2, s2).transpose(1, 0, 2, 3)            # (c4, N, s2, s2)

    # ConvT(c4 -> c2, cnn_kwargs[1]) -> GELU -> BN2d
    k, s, pd = k1["kernel_size"], k1.get("stride", 1), k1.get("padding", 0)
    xp = _dilate_pad_cnhw(h, s, k - 1 - pd)
    pt, (n_, ho, wo) = _im2col_T(xp, k)
    h = convT_gelu_bn(pt, p["ct1_w"], p["ct1_b"], p["bn3_g"], p["bn3_b"])
    h = h.reshape(-1, n_, ho, wo)

    # ConvT(c2 -> c, cnn_kwargs[0]) -> GELU -> BN2d
    k, s, pd = k0["kernel_size"], k0.get("stride", 1), k0.get("padding", 0)
    xp = _dilate_pad_cnhw(h, s, k - 1 - pd)
    pt, (n_, ho, wo) = _im2col_T(xp, k)
    h = convT_gelu_bn(pt, p["ct2_w"], p["ct2_b"], p["bn4_g"], p["bn4_b"])
    h = h.reshape(-1, n_, ho, wo)

    # ConvT(c -> nChannels, cnn_kwargs[0]) -> Sigmoid
    xp = _dilate_pad_cnhw(h, s, k - 1 - pd)
    pt, (n_, ho, wo) = _im2col_T(xp, k)
    h = convT_sigmoid(pt, p["ct3_w"], p["ct3_b"])
    h = h.reshape(-1, n_, ho, wo)

    # back to NCHW to match the PyTorch module's output layout
    return h.transpose(1, 0, 2, 3)


if __name__ == "__main__":
    # Hyperparameters implied by the module (RKM MNIST-style decoder, small variant).
    nChannels = 3
    capacity = 4
    x_fdim1, x_fdim2 = 32, 16
    cnn_kwargs = (dict(kernel_size=4, stride=2, padding=1),  # cnn_kwargs[0]
                  dict(kernel_size=3, stride=1),             # cnn_kwargs[1]
                  5)                                         # cnn_kwargs[2]
    N = 2

    c4, c2, c1 = capacity * 4, capacity * 2, capacity
    fdim_conv = c4 * cnn_kwargs[2] ** 2

    key = jax.random.PRNGKey(0)
    ks = jax.random.split(key, 20)

    def nrm(k, shape, scale=0.1):
        return (scale * jax.random.normal(k, shape)).astype(jnp.float32)

    raw_params = dict(
        # Linear layers stored as (in, out) for x @ W; biases broadcast over rows.
        w1=nrm(ks[0], (x_fdim2, x_fdim1)), b1=nrm(ks[1], (1, x_fdim1)),
        bn1_g=1.0 + nrm(ks[2], (1, x_fdim1)), bn1_b=nrm(ks[3], (1, x_fdim1)),
        w2=nrm(ks[4], (x_fdim1, fdim_conv)), b2=nrm(ks[5], (1, fdim_conv)),
        bn2_g=1.0 + nrm(ks[6], (1, fdim_conv)), bn2_b=nrm(ks[7], (1, fdim_conv)),
        # ConvTranspose2d weights in PyTorch layout (Cin, Cout, kH, kW);
        # per-channel params shaped (Cout, 1) for the channel-major conv layout.
        ct1_w=nrm(ks[8], (c4, c2, 3, 3)), ct1_b=nrm(ks[9], (c2, 1)),
        bn3_g=1.0 + nrm(ks[10], (c2, 1)), bn3_b=nrm(ks[11], (c2, 1)),
        ct2_w=nrm(ks[12], (c2, c1, 4, 4)), ct2_b=nrm(ks[13], (c1, 1)),
        bn4_g=1.0 + nrm(ks[14], (c1, 1)), bn4_b=nrm(ks[15], (c1, 1)),
        ct3_w=nrm(ks[16], (c1, nChannels, 4, 4)), ct3_b=nrm(ks[17], (nChannels, 1)),
    )
    params = prepare_params(raw_params)  # one-time weight prep, outside jit

    x = jax.random.normal(ks[18], (N, x_fdim2), dtype=jnp.float32)

    fwd = jax.jit(functools.partial(net3_forward, capacity=capacity,
                                    cnn_kwargs=cnn_kwargs))
    out = jax.block_until_ready(fwd(params, x))

    assert out.shape == (N, nChannels, 28, 28), out.shape
    assert bool(jnp.all(jnp.isfinite(out)))
    assert bool(jnp.all((out >= 0.0) & (out <= 1.0)))  # sigmoid output range
    print("KERNEL_OK")
</pallas_src>

<mosaic_0001>
module attributes {stable_mosaic.version = 11 : i64} {
  func.func @_fc_stack_kernel(%arg0: memref<2x16xf32, #tpu.memory_space<vmem>>, %arg1: memref<16x32xf32, #tpu.memory_space<vmem>>, %arg2: memref<1x32xf32, #tpu.memory_space<vmem>>, %arg3: memref<1x32xf32, #tpu.memory_space<vmem>>, %arg4: memref<1x32xf32, #tpu.memory_space<vmem>>, %arg5: memref<32x400xf32, #tpu.memory_space<vmem>>, %arg6: memref<1x400xf32, #tpu.memory_space<vmem>>, %arg7: memref<1x400xf32, #tpu.memory_space<vmem>>, %arg8: memref<1x400xf32, #tpu.memory_space<vmem>>, %arg9: memref<2x400xf32, #tpu.memory_space<vmem>>) attributes {dimension_semantics = [], scalar_prefetch = 0 : i64, scratch_operands = 0 : i64, tpu.core_type = #tpu.core_type<tc>} {
    %c0 = arith.constant 0 : index
    %c0_0 = arith.constant 0 : index
    %0 = vector.load %arg0[%c0, %c0_0] : memref<2x16xf32, #tpu.memory_space<vmem>>, vector<2x16xf32>
    %c0_1 = arith.constant 0 : index
    %c0_2 = arith.constant 0 : index
    %1 = vector.load %arg1[%c0_1, %c0_2] : memref<16x32xf32, #tpu.memory_space<vmem>>, vector<16x32xf32>
    %cst = arith.constant dense<0.000000e+00> : vector<2x32xf32>
    %2 = tpu.matmul %0, %1, %cst {dimension_numbers = #tpu.dot_dimension_numbers<[1], [0], [0], [1], [0, 0, 1, 1], [], []>} : vector<2x16xf32>, vector<16x32xf32>, vector<2x32xf32> -> vector<2x32xf32>
    %c0_3 = arith.constant 0 : index
    %c0_4 = arith.constant 0 : index
    %3 = vector.load %arg2[%c0_3, %c0_4] : memref<1x32xf32, #tpu.memory_space<vmem>>, vector<1x32xf32>
    %4 = vector.broadcast %3 : vector<1x32xf32> to vector<2x32xf32>
    %5 = arith.addf %2, %4 : vector<2x32xf32>
    %cst_5 = arith.constant 5.000000e-01 : f32
    %6 = vector.broadcast %cst_5 : f32 to vector<2x32xf32>
    %7 = arith.mulf %6, %5 : vector<2x32xf32>
    %cst_6 = arith.constant 0.707106769 : f32
    %8 = vector.broadcast %cst_6 : f32 to vector<2x32xf32>
    %9 = arith.mulf %5, %8 : vector<2x32xf32>
    %10 = math.absf %9 : vector<2x32xf32>
    %cst_7 = arith.constant 0.327591091 : f32
    %11 = vector.broadcast %cst_7 : f32 to vector<2x32xf32>
    %12 = arith.mulf %11, %10 : vector<2x32xf32>
    %cst_8 = arith.constant 1.000000e+00 : f32
    %13 = vector.broadcast %cst_8 : f32 to vector<2x32xf32>
    %14 = arith.addf %13, %12 : vector<2x32xf32>
    %15 = tpu.reciprocal %14 {approx = true} : vector<2x32xf32> -> vector<2x32xf32>
    %cst_9 = arith.constant 1.06140542 : f32
    %16 = vector.broadcast %cst_9 : f32 to vector<2x32xf32>
    %17 = arith.mulf %16, %15 : vector<2x32xf32>
    %cst_10 = arith.constant -1.45315206 : f32
    %18 = vector.broadcast %cst_10 : f32 to vector<2x32xf32>
    %19 = arith.addf %17, %18 : vector<2x32xf32>
    %20 = arith.mulf %19, %15 : vector<2x32xf32>
    %cst_11 = arith.constant 1.42141378 : f32
    %21 = vector.broadcast %cst_11 : f32 to vector<2x32xf32>
    %22 = arith.addf %20, %21 : vector<2x32xf32>
    %23 = arith.mulf %22, %15 : vector<2x32xf32>
    %cst_12 = arith.constant -0.284496725 : f32
    %24 = vector.broadcast %cst_12 : f32 to vector<2x32xf32>
    %25 = arith.addf %23, %24 : vector<2x32xf32>
    %26 = arith.mulf %25, %15 : vector<2x32xf32>
    %cst_13 = arith.constant 0.254829586 : f32
    %27 = vector.broadcast %cst_13 : f32 to vector<2x32xf32>
    %28 = arith.addf %26, %27 : vector<2x32xf32>
    %29 = arith.mulf %28, %15 : vector<2x32xf32>
    %cst_14 = arith.constant 0.000000e+00 : f32
    %30 = vector.broadcast %cst_14 : f32 to vector<2x32xf32>
    %31 = arith.subf %30, %10 : vector<2x32xf32>
    %32 = arith.mulf %31, %10 : vector<2x32xf32>
    %33 = math.exp %32 : vector<2x32xf32>
    %34 = arith.mulf %29, %33 : vector<2x32xf32>
    %cst_15 = arith.constant 1.000000e+00 : f32
    %35 = vector.broadcast %cst_15 : f32 to vector<2x32xf32>
    %36 = arith.subf %35, %34 : vector<2x32xf32>
    %cst_16 = arith.constant 0.000000e+00 : f32
    %37 = vector.broadcast %cst_16 : f32 to vector<2x32xf32>
    %38 = arith.cmpf oge, %9, %37 : vector<2x32xf32>
    %cst_17 = arith.constant 0.000000e+00 : f32
    %39 = vector.broadcast %cst_17 : f32 to vector<2x32xf32>
    %40 = arith.subf %39, %36 : vector<2x32xf32>
    %41 = arith.select %38, %36, %40 : vector<2x32xi1>, vector<2x32xf32>
    %cst_18 = arith.constant 1.000000e+00 : f32
    %42 = vector.broadcast %cst_18 : f32 to vector<2x32xf32>
    %43 = arith.addf %42, %41 : vector<2x32xf32>
    %44 = arith.mulf %7, %43 : vector<2x32xf32>
    %c0_19 = arith.constant 0 : index
    %c0_20 = arith.constant 0 : index
    %45 = vector.load %arg3[%c0_19, %c0_20] : memref<1x32xf32, #tpu.memory_space<vmem>>, vector<1x32xf32>
    %c0_21 = arith.constant 0 : index
    %c0_22 = arith.constant 0 : index
    %46 = vector.load %arg4[%c0_21, %c0_22] : memref<1x32xf32, #tpu.memory_space<vmem>>, vector<1x32xf32>
    %cst_23 = arith.constant dense<0.000000e+00> : vector<32xf32>
    %47 = vector.multi_reduction <add>, %44, %cst_23 [0] : vector<2x32xf32> to vector<32xf32>
    %48 = vector.shape_cast %47 : vector<32xf32> to vector<1x32xf32>
    %cst_24 = arith.constant 2.000000e+00 : f32
    %49 = vector.broadcast %cst_24 : f32 to vector<1x32xf32>
    %50 = arith.divf %48, %49 : vector<1x32xf32>
    %51 = vector.broadcast %50 : vector<1x32xf32> to vector<2x32xf32>
    %52 = arith.subf %44, %51 : vector<2x32xf32>
    %53 = arith.mulf %52, %52 : vector<2x32xf32>
    %cst_25 = arith.constant dense<0.000000e+00> : vector<32xf32>
    %54 = vector.multi_reduction <add>, %53, %cst_25 [0] : vector<2x32xf32> to vector<32xf32>
    %55 = vector.shape_cast %54 : vector<32xf32> to vector<1x32xf32>
    %cst_26 = arith.constant 2.000000e+00 : f32
    %56 = vector.broadcast %cst_26 : f32 to vector<1x32xf32>
    %57 = arith.divf %55, %56 : vector<1x32xf32>
    %58 = vector.broadcast %50 : vector<1x32xf32> to vector<2x32xf32>
    %59 = arith.subf %44, %58 : vector<2x32xf32>
    %cst_27 = arith.constant 9.99999974E-6 : f32
    %60 = vector.broadcast %cst_27 : f32 to vector<1x32xf32>
    %61 = arith.addf %57, %60 : vector<1x32xf32>
    %62 = math.rsqrt %61 : vector<1x32xf32>
    %63 = vector.broadcast %62 : vector<1x32xf32> to vector<2x32xf32>
    %64 = arith.mulf %59, %63 : vector<2x32xf32>
    %65 = vector.broadcast %45 : vector<1x32xf32> to vector<2x32xf32>
    %66 = arith.mulf %64, %65 : vector<2x32xf32>
    %67 = vector.broadcast %46 : vector<1x32xf32> to vector<2x32xf32>
    %68 = arith.addf %66, %67 : vector<2x32xf32>
    %c0_28 = arith.constant 0 : index
    %c0_29 = arith.constant 0 : index
    %69 = vector.load %arg5[%c0_28, %c0_29] : memref<32x400xf32, #tpu.memory_space<vmem>>, vector<32x400xf32>
    %cst_30 = arith.constant dense<0.000000e+00> : vector<2x400xf32>
    %70 = tpu.matmul %68, %69, %cst_30 {dimension_numbers = #tpu.dot_dimension_numbers<[1], [0], [0], [1], [0, 0, 1, 1], [], []>} : vector<2x32xf32>, vector<32x400xf32>, vector<2x400xf32> -> vector<2x400xf32>
    %c0_31 = arith.constant 0 : index
    %c0_32 = arith.constant 0 : index
    %71 = vector.load %arg6[%c0_31, %c0_32] : memref<1x400xf32, #tpu.memory_space<vmem>>, vector<1x400xf32>
    %72 = vector.broadcast %71 : vector<1x400xf32> to vector<2x400xf32>
    %73 = arith.addf %70, %72 : vector<2x400xf32>
    %cst_33 = arith.constant 5.000000e-01 : f32
    %74 = vector.broadcast %cst_33 : f32 to vector<2x400xf32>
    %75 = arith.mulf %74, %73 : vector<2x400xf32>
    %cst_34 = arith.constant 0.707106769 : f32
    %76 = vector.broadcast %cst_34 : f32 to vector<2x400xf32>
    %77 = arith.mulf %73, %76 : vector<2x400xf32>
    %78 = math.absf %77 : vector<2x400xf32>
    %cst_35 = arith.constant 0.327591091 : f32
    %79 = vector.broadcast %cst_35 : f32 to vector<2x400xf32>
    %80 = arith.mulf %79, %78 : vector<2x400xf32>
    %cst_36 = arith.constant 1.000000e+00 : f32
    %81 = vector.broadcast %cst_36 : f32 to vector<2x400xf32>
    %82 = arith.addf %81, %80 : vector<2x400xf32>
    %83 = tpu.reciprocal %82 {approx = true} : vector<2x400xf32> -> vector<2x400xf32>
    %cst_37 = arith.constant 1.06140542 : f32
    %84 = vector.broadcast %cst_37 : f32 to vector<2x400xf32>
    %85 = arith.mulf %84, %83 : vector<2x400xf32>
    %cst_38 = arith.constant -1.45315206 : f32
    %86 = vector.broadcast %cst_38 : f32 to vector<2x400xf32>
    %87 = arith.addf %85, %86 : vector<2x400xf32>
    %88 = arith.mulf %87, %83 : vector<2x400xf32>
    %cst_39 = arith.constant 1.42141378 : f32
    %89 = vector.broadcast %cst_39 : f32 to vector<2x400xf32>
    %90 = arith.addf %88, %89 : vector<2x400xf32>
    %91 = arith.mulf %90, %83 : vector<2x400xf32>
    %cst_40 = arith.constant -0.284496725 : f32
    %92 = vector.broadcast %cst_40 : f32 to vector<2x400xf32>
    %93 = arith.addf %91, %92 : vector<2x400xf32>
    %94 = arith.mulf %93, %83 : vector<2x400xf32>
    %cst_41 = arith.constant 0.254829586 : f32
    %95 = vector.broadcast %cst_41 : f32 to vector<2x400xf32>
    %96 = arith.addf %94, %95 : vector<2x400xf32>
    %97 = arith.mulf %96, %83 : vector<2x400xf32>
    %cst_42 = arith.constant 0.000000e+00 : f32
    %98 = vector.broadcast %cst_42 : f32 to vector<2x400xf32>
    %99 = arith.subf %98, %78 : vector<2x400xf32>
    %100 = arith.mulf %99, %78 : vector<2x400xf32>
    %101 = math.exp %100 : vector<2x400xf32>
    %102 = arith.mulf %97, %101 : vector<2x400xf32>
    %cst_43 = arith.constant 1.000000e+00 : f32
    %103 = vector.broadcast %cst_43 : f32 to vector<2x400xf32>
    %104 = arith.subf %103, %102 : vector<2x400xf32>
    %cst_44 = arith.constant 0.000000e+00 : f32
    %105 = vector.broadcast %cst_44 : f32 to vector<2x400xf32>
    %106 = arith.cmpf oge, %77, %105 : vector<2x400xf32>
    %cst_45 = arith.constant 0.000000e+00 : f32
    %107 = vector.broadcast %cst_45 : f32 to vector<2x400xf32>
    %108 = arith.subf %107, %104 : vector<2x400xf32>
    %109 = arith.select %106, %104, %108 : vector<2x400xi1>, vector<2x400xf32>
    %cst_46 = arith.constant 1.000000e+00 : f32
    %110 = vector.broadcast %cst_46 : f32 to vector<2x400xf32>
    %111 = arith.addf %110, %109 : vector<2x400xf32>
    %112 = arith.mulf %75, %111 : vector<2x400xf32>
    %c0_47 = arith.constant 0 : index
    %c0_48 = arith.constant 0 : index
    %113 = vector.load %arg7[%c0_47, %c0_48] : memref<1x400xf32, #tpu.memory_space<vmem>>, vector<1x400xf32>
    %c0_49 = arith.constant 0 : index
    %c0_50 = arith.constant 0 : index
    %114 = vector.load %arg8[%c0_49, %c0_50] : memref<1x400xf32, #tpu.memory_space<vmem>>, vector<1x400xf32>
    %cst_51 = arith.constant dense<0.000000e+00> : vector<400xf32>
    %115 = vector.multi_reduction <add>, %112, %cst_51 [0] : vector<2x400xf32> to vector<400xf32>
    %116 = vector.shape_cast %115 : vector<400xf32> to vector<1x400xf32>
    %cst_52 = arith.constant 2.000000e+00 : f32
    %117 = vector.broadcast %cst_52 : f32 to vector<1x400xf32>
    %118 = arith.divf %116, %117 : vector<1x400xf32>
    %119 = vector.broadcast %118 : vector<1x400xf32> to vector<2x400xf32>
    %120 = arith.subf %112, %119 : vector<2x400xf32>
    %121 = arith.mulf %120, %120 : vector<2x400xf32>
    %cst_53 = arith.constant dense<0.000000e+00> : vector<400xf32>
    %122 = vector.multi_reduction <add>, %121, %cst_53 [0] : vector<2x400xf32> to vector<400xf32>
    %123 = vector.shape_cast %122 : vector<400xf32> to vector<1x400xf32>
    %cst_54 = arith.constant 2.000000e+00 : f32
    %124 = vector.broadcast %cst_54 : f32 to vector<1x400xf32>
    %125 = arith.divf %123, %124 : vector<1x400xf32>
    %126 = vector.broadcast %118 : vector<1x400xf32> to vector<2x400xf32>
    %127 = arith.subf %112, %126 : vector<2x400xf32>
    %cst_55 = arith.constant 9.99999974E-6 : f32
    %128 = vector.broadcast %cst_55 : f32 to vector<1x400xf32>
    %129 = arith.addf %125, %128 : vector<1x400xf32>
    %130 = math.rsqrt %129 : vector<1x400xf32>
    %131 = vector.broadcast %130 : vector<1x400xf32> to vector<2x400xf32>
    %132 = arith.mulf %127, %131 : vector<2x400xf32>
    %133 = vector.broadcast %113 : vector<1x400xf32> to vector<2x400xf32>
    %134 = arith.mulf %132, %133 : vector<2x400xf32>
    %135 = vector.broadcast %114 : vector<1x400xf32> to vector<2x400xf32>
    %136 = arith.addf %134, %135 : vector<2x400xf32>
    %c0_56 = arith.constant 0 : index
    %c0_57 = arith.constant 0 : index
    %137 = vector.load %arg9[%c0_56, %c0_57] : memref<2x400xf32, #tpu.memory_space<vmem>>, vector<2x400xf32>
    tpu.vector_store %arg9[%c0_56, %c0_57], %136 {strides = array<i32>} : memref<2x400xf32, #tpu.memory_space<vmem>>, vector<2x400xf32>,
    return
  }
}

module attributes {stable_mosaic.version = 11 : i64} {
  func.func @_convT_gelu_bn_kernel(%arg0: memref<144x98xf32, #tpu.memory_space<vmem>>, %arg1: memref<8x144xf32, #tpu.memory_space<vmem>>, %arg2: memref<8x1xf32, #tpu.memory_space<vmem>>, %arg3: memref<8x1xf32, #tpu.memory_space<vmem>>, %arg4: memref<8x1xf32, #tpu.memory_space<vmem>>, %arg5: memref<8x98xf32, #tpu.memory_space<vmem>>) attributes {dimension_semantics = [], scalar_prefetch = 0 : i64, scratch_operands = 0 : i64, tpu.core_type = #tpu.core_type<tc>} {
    %c0 = arith.constant 0 : index
    %c0_0 = arith.constant 0 : index
    %0 = vector.load %arg1[%c0, %c0_0] : memref<8x144xf32, #tpu.memory_space<vmem>>, vector<8x144xf32>
    %c0_1 = arith.constant 0 : index
    %c0_2 = arith.constant 0 : index
    %1 = vector.load %arg0[%c0_1, %c0_2] : memref<144x98xf32, #tpu.memory_space<vmem>>, vector<144x98xf32>
    %cst = arith.constant dense<0.000000e+00> : vector<8x98xf32>
    %2 = tpu.matmul %0, %1, %cst {dimension_numbers = #tpu.dot_dimension_numbers<[1], [0], [0], [1], [0, 0, 1, 1], [], []>} : vector<8x144xf32>, vector<144x98xf32>, vector<8x98xf32> -> vector<8x98xf32>
    %c0_3 = arith.constant 0 : index
    %c0_4 = arith.constant 0 : index
    %3 = vector.load %arg2[%c0_3, %c0_4] : memref<8x1xf32, #tpu.memory_space<vmem>>, vector<8x1xf32>
    %4 = vector.broadcast %3 : vector<8x1xf32> to vector<8x98xf32>
    %5 = arith.addf %2, %4 : vector<8x98xf32>
    %cst_5 = arith.constant 5.000000e-01 : f32
    %6 = vector.broadcast %cst_5 : f32 to vector<8x98xf32>
    %7 = arith.mulf %6, %5 : vector<8x98xf32>
    %cst_6 = arith.constant 0.707106769 : f32
    %8 = vector.broadcast %cst_6 : f32 to vector<8x98xf32>
    %9 = arith.mulf %5, %8 : vector<8x98xf32>
    %10 = math.absf %9 : vector<8x98xf32>
    %cst_7 = arith.constant 0.327591091 : f32
    %11 = vector.broadcast %cst_7 : f32 to vector<8x98xf32>
    %12 = arith.mulf %11, %10 : vector<8x98xf32>
    %cst_8 = arith.constant 1.000000e+00 : f32
    %13 = vector.broadcast %cst_8 : f32 to vector<8x98xf32>
    %14 = arith.addf %13, %12 : vector<8x98xf32>
    %15 = tpu.reciprocal %14 {approx = true} : vector<8x98xf32> -> vector<8x98xf32>
    %cst_9 = arith.constant 1.06140542 : f32
    %16 = vector.broadcast %cst_9 : f32 to vector<8x98xf32>
    %17 = arith.mulf %16, %15 : vector<8x98xf32>
    %cst_10 = arith.constant -1.45315206 : f32
    %18 = vector.broadcast %cst_10 : f32 to vector<8x98xf32>
    %19 = arith.addf %17, %18 : vector<8x98xf32>
    %20 = arith.mulf %19, %15 : vector<8x98xf32>
    %cst_11 = arith.constant 1.42141378 : f32
    %21 = vector.broadcast %cst_11 : f32 to vector<8x98xf32>
    %22 = arith.addf %20, %21 : vector<8x98xf32>
    %23 = arith.mulf %22, %15 : vector<8x98xf32>
    %cst_12 = arith.constant -0.284496725 : f32
    %24 = vector.broadcast %cst_12 : f32 to vector<8x98xf32>
    %25 = arith.addf %23, %24 : vector<8x98xf32>
    %26 = arith.mulf %25, %15 : vector<8x98xf32>
    %cst_13 = arith.constant 0.254829586 : f32
    %27 = vector.broadcast %cst_13 : f32 to vector<8x98xf32>
    %28 = arith.addf %26, %27 : vector<8x98xf32>
    %29 = arith.mulf %28, %15 : vector<8x98xf32>
    %cst_14 = arith.constant 0.000000e+00 : f32
    %30 = vector.broadcast %cst_14 : f32 to vector<8x98xf32>
    %31 = arith.subf %30, %10 : vector<8x98xf32>
    %32 = arith.mulf %31, %10 : vector<8x98xf32>
    %33 = math.exp %32 : vector<8x98xf32>
    %34 = arith.mulf %29, %33 : vector<8x98xf32>
    %cst_15 = arith.constant 1.000000e+00 : f32
    %35 = vector.broadcast %cst_15 : f32 to vector<8x98xf32>
    %36 = arith.subf %35, %34 : vector<8x98xf32>
    %cst_16 = arith.constant 0.000000e+00 : f32
    %37 = vector.broadcast %cst_16 : f32 to vector<8x98xf32>
    %38 = arith.cmpf oge, %9, %37 : vector<8x98xf32>
    %cst_17 = arith.constant 0.000000e+00 : f32
    %39 = vector.broadcast %cst_17 : f32 to vector<8x98xf32>
    %40 = arith.subf %39, %36 : vector<8x98xf32>
    %41 = arith.select %38, %36, %40 : vector<8x98xi1>, vector<8x98xf32>
    %cst_18 = arith.constant 1.000000e+00 : f32
    %42 = vector.broadcast %cst_18 : f32 to vector<8x98xf32>
    %43 = arith.addf %42, %41 : vector<8x98xf32>
    %44 = arith.mulf %7, %43 : vector<8x98xf32>
    %c0_19 = arith.constant 0 : index
    %c0_20 = arith.constant 0 : index
    %45 = vector.load %arg3[%c0_19, %c0_20] : memref<8x1xf32, #tpu.memory_space<vmem>>, vector<8x1xf32>
    %c0_21 = arith.constant 0 : index
    %c0_22 = arith.constant 0 : index
    %46 = vector.load %arg4[%c0_21, %c0_22] : memref<8x1xf32, #tpu.memory_space<vmem>>, vector<8x1xf32>
    %cst_23 = arith.constant dense<0.000000e+00> : vector<8xf32>
    %47 = vector.multi_reduction <add>, %44, %cst_23 [1] : vector<8x98xf32> to vector<8xf32>
    %48 = vector.shape_cast %47 : vector<8xf32> to vector<8x1xf32>
    %cst_24 = arith.constant 9.800000e+01 : f32
    %49 = vector.broadcast %cst_24 : f32 to vector<8x1xf32>
    %50 = arith.divf %48, %49 : vector<8x1xf32>
    %51 = vector.broadcast %50 : vector<8x1xf32> to vector<8x98xf32>
    %52 = arith.subf %44, %51 : vector<8x98xf32>
    %53 = arith.mulf %52, %52 : vector<8x98xf32>
    %cst_25 = arith.constant dense<0.000000e+00> : vector<8xf32>
    %54 = vector.multi_reduction <add>, %53, %cst_25 [1] : vector<8x98xf32> to vector<8xf32>
    %55 = vector.shape_cast %54 : vector<8xf32> to vector<8x1xf32>
    %cst_26 = arith.constant 9.800000e+01 : f32
    %56 = vector.broadcast %cst_26 : f32 to vector<8x1xf32>
    %57 = arith.divf %55, %56 : vector<8x1xf32>
    %58 = vector.broadcast %50 : vector<8x1xf32> to vector<8x98xf32>
    %59 = arith.subf %44, %58 : vector<8x98xf32>
    %cst_27 = arith.constant 9.99999974E-6 : f32
    %60 = vector.broadcast %cst_27 : f32 to vector<8x1xf32>
    %61 = arith.addf %57, %60 : vector<8x1xf32>
    %62 = math.rsqrt %61 : vector<8x1xf32>
    %63 = vector.broadcast %62 : vector<8x1xf32> to vector<8x98xf32>
    %64 = arith.mulf %59, %63 : vector<8x98xf32>
    %65 = vector.broadcast %45 : vector<8x1xf32> to vector<8x98xf32>
    %66 = arith.mulf %64, %65 : vector<8x98xf32>
    %67 = vector.broadcast %46 : vector<8x1xf32> to vector<8x98xf32>
    %68 = arith.addf %66, %67 : vector<8x98xf32>
    %c0_28 = arith.constant 0 : index
    %c0_29 = arith.constant 0 : index
    %69 = vector.load %arg5[%c0_28, %c0_29] : memref<8x98xf32, #tpu.memory_space<vmem>>, vector<8x98xf32>
    tpu.vector_store %arg5[%c0_28, %c0_29], %68 {strides = array<i32>} : memref<8x98xf32, #tpu.memory_space<vmem>>, vector<8x98xf32>,
    return
  }
}

module attributes {stable_mosaic.version = 11 : i64} {
  func.func @_convT_gelu_bn_kernel(%arg0: memref<128x392xf32, #tpu.memory_space<vmem>>, %arg1: memref<4x128xf32, #tpu.memory_space<vmem>>, %arg2: memref<4x1xf32, #tpu.memory_space<vmem>>, %arg3: memref<4x1xf32, #tpu.memory_space<vmem>>, %arg4: memref<4x1xf32, #tpu.memory_space<vmem>>, %arg5: memref<4x392xf32, #tpu.memory_space<vmem>>) attributes {dimension_semantics = [], scalar_prefetch = 0 : i64, scratch_operands = 0 : i64, tpu.core_type = #tpu.core_type<tc>} {
    %c0 = arith.constant 0 : index
    %c0_0 = arith.constant 0 : index
    %0 = vector.load %arg1[%c0, %c0_0] : memref<4x128xf32, #tpu.memory_space<vmem>>, vector<4x128xf32>
    %c0_1 = arith.constant 0 : index
    %c0_2 = arith.constant 0 : index
    %1 = vector.load %arg0[%c0_1, %c0_2] : memref<128x392xf32, #tpu.memory_space<vmem>>, vector<128x392xf32>
    %cst = arith.constant dense<0.000000e+00> : vector<4x392xf32>
    %2 = tpu.matmul %0, %1, %cst {dimension_numbers = #tpu.dot_dimension_numbers<[1], [0], [0], [1], [0, 0, 1, 1], [], []>} : vector<4x128xf32>, vector<128x392xf32>, vector<4x392xf32> -> vector<4x392xf32>
    %c0_3 = arith.constant 0 : index
    %c0_4 = arith.constant 0 : index
    %3 = vector.load %arg2[%c0_3, %c0_4] : memref<4x1xf32, #tpu.memory_space<vmem>>, vector<4x1xf32>
    %4 = vector.broadcast %3 : vector<4x1xf32> to vector<4x392xf32>
    %5 = arith.addf %2, %4 : vector<4x392xf32>
    %cst_5 = arith.constant 5.000000e-01 : f32
    %6 = vector.broadcast %cst_5 : f32 to vector<4x392xf32>
    %7 = arith.mulf %6, %5 : vector<4x392xf32>
    %cst_6 = arith.constant 0.707106769 : f32
    %8 = vector.broadcast %cst_6 : f32 to vector<4x392xf32>
    %9 = arith.mulf %5, %8 : vector<4x392xf32>
    %10 = math.absf %9 : vector<4x392xf32>
    %cst_7 = arith.constant 0.327591091 : f32
    %11 = vector.broadcast %cst_7 : f32 to vector<4x392xf32>
    %12 = arith.mulf %11, %10 : vector<4x392xf32>
    %cst_8 = arith.constant 1.000000e+00 : f32
    %13 = vector.broadcast %cst_8 : f32 to vector<4x392xf32>
    %14 = arith.addf %13, %12 : vector<4x392xf32>
    %15 = tpu.reciprocal %14 {approx = true} : vector<4x392xf32> -> vector<4x392xf32>
    %cst_9 = arith.constant 1.06140542 : f32
    %16 = vector.broadcast %cst_9 : f32 to vector<4x392xf32>
    %17 = arith.mulf %16, %15 : vector<4x392xf32>
    %cst_10 = arith.constant -1.45315206 : f32
    %18 = vector.broadcast %cst_10 : f32 to vector<4x392xf32>
    %19 = arith.addf %17, %18 : vector<4x392xf32>
    %20 = arith.mulf %19, %15 : vector<4x392xf32>
    %cst_11 = arith.constant 1.42141378 : f32
    %21 = vector.broadcast %cst_11 : f32 to vector<4x392xf32>
    %22 = arith.addf %20, %21 : vector<4x392xf32>
    %23 = arith.mulf %22, %15 : vector<4x392xf32>
    %cst_12 = arith.constant -0.284496725 : f32
    %24 = vector.broadcast %cst_12 : f32 to vector<4x392xf32>
    %25 = arith.addf %23, %24 : vector<4x392xf32>
    %26 = arith.mulf %25, %15 : vector<4x392xf32>
    %cst_13 = arith.constant 0.254829586 : f32
    %27 = vector.broadcast %cst_13 : f32 to vector<4x392xf32>
    %28 = arith.addf %26, %27 : vector<4x392xf32>
    %29 = arith.mulf %28, %15 : vector<4x392xf32>
    %cst_14 = arith.constant 0.000000e+00 : f32
    %30 = vector.broadcast %cst_14 : f32 to vector<4x392xf32>
    %31 = arith.subf %30, %10 : vector<4x392xf32>
    %32 = arith.mulf %31, %10 : vector<4x392xf32>
    %33 = math.exp %32 : vector<4x392xf32>
    %34 = arith.mulf %29, %33 : vector<4x392xf32>
    %cst_15 = arith.constant 1.000000e+00 : f32
    %35 = vector.broadcast %cst_15 : f32 to vector<4x392xf32>
    %36 = arith.subf %35, %34 : vector<4x392xf32>
    %cst_16 = arith.constant 0.000000e+00 : f32
    %37 = vector.broadcast %cst_16 : f32 to vector<4x392xf32>
    %38 = arith.cmpf oge, %9, %37 : vector<4x392xf32>
    %cst_17 = arith.constant 0.000000e+00 : f32
    %39 = vector.broadcast %cst_17 : f32 to vector<4x392xf32>
    %40 = arith.subf %39, %36 : vector<4x392xf32>
    %41 = arith.select %38, %36, %40 : vector<4x392xi1>, vector<4x392xf32>
    %cst_18 = arith.constant 1.000000e+00 : f32
    %42 = vector.broadcast %cst_18 : f32 to vector<4x392xf32>
    %43 = arith.addf %42, %41 : vector<4x392xf32>
    %44 = arith.mulf %7, %43 : vector<4x392xf32>
    %c0_19 = arith.constant 0 : index
    %c0_20 = arith.constant 0 : index
    %45 = vector.load %arg3[%c0_19, %c0_20] : memref<4x1xf32, #tpu.memory_space<vmem>>, vector<4x1xf32>
    %c0_21 = arith.constant 0 : index
    %c0_22 = arith.constant 0 : index
    %46 = vector.load %arg4[%c0_21, %c0_22] : memref<4x1xf32, #tpu.memory_space<vmem>>, vector<4x1xf32>
    %cst_23 = arith.constant dense<0.000000e+00> : vector<4xf32>
    %47 = vector.multi_reduction <add>, %44, %cst_23 [1] : vector<4x392xf32> to vector<4xf32>
    %48 = vector.shape_cast %47 : vector<4xf32> to vector<4x1xf32>
    %cst_24 = arith.constant 3.920000e+02 : f32
    %49 = vector.broadcast %cst_24 : f32 to vector<4x1xf32>
    %50 = arith.divf %48, %49 : vector<4x1xf32>
    %51 = vector.broadcast %50 : vector<4x1xf32> to vector<4x392xf32>
    %52 = arith.subf %44, %51 : vector<4x392xf32>
    %53 = arith.mulf %52, %52 : vector<4x392xf32>
    %cst_25 = arith.constant dense<0.000000e+00> : vector<4xf32>
    %54 = vector.multi_reduction <add>, %53, %cst_25 [1] : vector<4x392xf32> to vector<4xf32>
    %55 = vector.shape_cast %54 : vector<4xf32> to vector<4x1xf32>
    %cst_26 = arith.constant 3.920000e+02 : f32
    %56 = vector.broadcast %cst_26 : f32 to vector<4x1xf32>
    %57 = arith.divf %55, %56 : vector<4x1xf32>
    %58 = vector.broadcast %50 : vector<4x1xf32> to vector<4x392xf32>
    %59 = arith.subf %44, %58 : vector<4x392xf32>
    %cst_27 = arith.constant 9.99999974E-6 : f32
    %60 = vector.broadcast %cst_27 : f32 to vector<4x1xf32>
    %61 = arith.addf %57, %60 : vector<4x1xf32>
    %62 = math.rsqrt %61 : vector<4x1xf32>
    %63 = vector.broadcast %62 : vector<4x1xf32> to vector<4x392xf32>
    %64 = arith.mulf %59, %63 : vector<4x392xf32>
    %65 = vector.broadcast %45 : vector<4x1xf32> to vector<4x392xf32>
    %66 = arith.mulf %64, %65 : vector<4x392xf32>
    %67 = vector.broadcast %46 : vector<4x1xf32> to vector<4x392xf32>
    %68 = arith.addf %66, %67 : vector<4x392xf32>
    %c0_28 = arith.constant 0 : index
    %c0_29 = arith.constant 0 : index
    %69 = vector.load %arg5[%c0_28, %c0_29] : memref<4x392xf32, #tpu.memory_space<vmem>>, vector<4x392xf32>
    tpu.vector_store %arg5[%c0_28, %c0_29], %68 {strides = array<i32>} : memref<4x392xf32, #tpu.memory_space<vmem>>, vector<4x392xf32>,
    return
  }
}

module attributes {stable_mosaic.version = 11 : i64} {
  func.func @_convT_sigmoid_kernel(%arg0: memref<64x1568xf32, #tpu.memory_space<vmem>>, %arg1: memref<3x64xf32, #tpu.memory_space<vmem>>, %arg2: memref<3x1xf32, #tpu.memory_space<vmem>>, %arg3: memref<3x1568xf32, #tpu.memory_space<vmem>>) attributes {dimension_semantics = [], scalar_prefetch = 0 : i64, scratch_operands = 0 : i64, tpu.core_type = #tpu.core_type<tc>} {
    %c0 = arith.constant 0 : index
    %c0_0 = arith.constant 0 : index
    %0 = vector.load %arg1[%c0, %c0_0] : memref<3x64xf32, #tpu.memory_space<vmem>>, vector<3x64xf32>
    %c0_1 = arith.constant 0 : index
    %c0_2 = arith.constant 0 : index
    %1 = vector.load %arg0[%c0_1, %c0_2] : memref<64x1568xf32, #tpu.memory_space<vmem>>, vector<64x1568xf32>
    %cst = arith.constant dense<0.000000e+00> : vector<3x1568xf32>
    %2 = tpu.matmul %0, %1, %cst {dimension_numbers = #tpu.dot_dimension_numbers<[1], [0], [0], [1], [0, 0, 1, 1], [], []>} : vector<3x64xf32>, vector<64x1568xf32>, vector<3x1568xf32> -> vector<3x1568xf32>
    %c0_3 = arith.constant 0 : index
    %c0_4 = arith.constant 0 : index
    %3 = vector.load %arg2[%c0_3, %c0_4] : memref<3x1xf32, #tpu.memory_space<vmem>>, vector<3x1xf32>
    %4 = vector.broadcast %3 : vector<3x1xf32> to vector<3x1568xf32>
    %5 = arith.addf %2, %4 : vector<3x1568xf32>
    %cst_5 = arith.constant 5.000000e-01 : f32
    %6 = vector.broadcast %cst_5 : f32 to vector<3x1568xf32>
    %7 = arith.mulf %6, %5 : vector<3x1568xf32>
    %8 = math.tanh %7 : vector<3x1568xf32>
    %cst_6 = arith.constant 1.000000e+00 : f32
    %9 = vector.broadcast %cst_6 : f32 to vector<3x1568xf32>
    %10 = arith.addf %8, %9 : vector<3x1568xf32>
    %cst_7 = arith.constant 5.000000e-01 : f32
    %11 = vector.broadcast %cst_7 : f32 to vector<3x1568xf32>
    %12 = arith.mulf %11, %10 : vector<3x1568xf32>
    %c0_8 = arith.constant 0 : index
    %c0_9 = arith.constant 0 : index
    %13 = vector.load %arg3[%c0_8, %c0_9] : memref<3x1568xf32, #tpu.memory_space<vmem>>, vector<3x1568xf32>
    tpu.vector_store %arg3[%c0_8, %c0_9], %12 {strides = array<i32>} : memref<3x1568xf32, #tpu.memory_space<vmem>>, vector<3x1568xf32>,
    return
  }
}

</mosaic_0001>

<llo_original>
// kernel: net3_forward.4
$region0: #{net3_forward.4}
  #allocation0 [shape = 'u32[]', space=smem, size = 0x4, offset = 0x4, fixed_abs, tag = 'smem constant byte address 0x4 - core index']
  #allocation1 [shape = 'u32[144,128]{1,0:T(1,128)}', space=vmem, size = 0x12000, scoped, tag = 'internal scratch']
  %s0 = inlined_call_operand.vmem [shape: f32[2,16], index: 0, kind: input, shape index: {}]
  %s1 = inlined_call_operand.vmem [shape: f32[16,32], index: 1, kind: input, shape index: {}]
  %s2 = inlined_call_operand.vmem [shape: f32[1,32], index: 2, kind: input, shape index: {}]
  %s3 = inlined_call_operand.vmem [shape: f32[1,32], index: 3, kind: input, shape index: {}]
  %s4 = inlined_call_operand.vmem [shape: f32[1,32], index: 4, kind: input, shape index: {}]
  %s5 = inlined_call_operand.hbm [shape: f32[32,400], index: 5, kind: input, shape index: {}]
  %s6 = inlined_call_operand.vmem [shape: f32[1,400], index: 6, kind: input, shape index: {}]
  %s7 = inlined_call_operand.vmem [shape: f32[1,400], index: 7, kind: input, shape index: {}]
  %s8 = inlined_call_operand.vmem [shape: f32[1,400], index: 8, kind: input, shape index: {}]
  %s9 = inlined_call_operand.vmem [shape: f32[2,400], index: 9, kind: output, shape index: {}]
  %s10 = sld [smem:[#allocation0]]
  $region50: #{net3_forward.4} parent=0
    _
  %s12 = ssub.s32 1, %s10
  %s13 = scalar_select 0, %s12, %s10
  $region1: #{net3_forward.4} parent=0
    #allocation2 [shape = 'u8[65536]{0}', space=vmem, size = 0x10000, scoped, tag = 'input window, operand 5, single buffered']
    #allocation3 [shape = 's32[1]{0}', space=sflag, size = 0x4, scoped, tag = 'scoped memory for net3_forward.4']
    %14 = vsyncpa [#allocation3], 0
    // Predicated region
    $region2: #{net3_forward.4} parent=1 // pred_check
      _
    $region3: #{net3_forward.4} parent=1 // pred_check_branch
      %16 = sbr.rel (0) target = $region5
    $region4: #{net3_forward.4} parent=1 // pred_region
      _
    $region5: #{net3_forward.4} parent=1 // pred_fallthru
      _
    // Predicated region
    $region6: #{net3_forward.4} parent=1 // pred_check
      _
    $region7: #{net3_forward.4} parent=1 // pred_check_branch
      %18 = sbr.rel (0) target = $region9
    $region8: #{net3_forward.4} parent=1 // pred_region
      _
    $region9: #{net3_forward.4} parent=1 // pred_fallthru
      _
    // Predicated region
    $region10: #{net3_forward.4} parent=1 // pred_check
      _
    $region11: #{net3_forward.4} parent=1 // pred_check_branch
      %20 = sbr.rel (0) target = $region13
    $region12: #{net3_forward.4} parent=1 // pred_region
      _
    $region13: #{net3_forward.4} parent=1 // pred_fallthru
      _
    // Predicated region
    $region14: #{net3_forward.4} parent=1 // pred_check
      _
    $region15: #{net3_forward.4} parent=1 // pred_check_branch
      %22 = sbr.rel (0) target = $region17
    $region16: #{net3_forward.4} parent=1 // pred_region
      _
    $region17: #{net3_forward.4} parent=1 // pred_fallthru
      _
    // Predicated region
    $region18: #{net3_forward.4} parent=1 // pred_check
      _
    $region19: #{net3_forward.4} parent=1 // pred_check_branch
      %24 = sbr.rel (0) target = $region21
    $region20: #{net3_forward.4} parent=1 // pred_region
      _
    $region21: #{net3_forward.4} parent=1 // pred_fallthru
      _
    // Predicated region
    $region22: #{net3_forward.4} parent=1 // pred_check
      _
    $region23: #{net3_forward.4} parent=1 // pred_check_branch
      %26 = sbr.rel (0) target = $region25
    $region24: #{net3_forward.4} parent=1 // pred_region
      %s28 = ssub.s32 2048, 2048
      %29 = vsyncadd [#allocation3], %s28
      %s30 = sshll.u32 [#allocation2], 4
      %s31 = int_to_ptr.vmem [resolvable:$true] %s30
      %36 = dma.hbm_to_vmem [thread:$0]  %s5, 2048, %s31, [#allocation3], 512, 512, 32
    $region25: #{net3_forward.4} parent=1 // pred_fallthru
      _
    // Predicated region
    $region26: #{net3_forward.4} parent=1 // pred_check
      _
    $region27: #{net3_forward.4} parent=1 // pred_check_branch
      %38 = sbr.rel (0) target = $region29
    $region28: #{net3_forward.4} parent=1 // pred_region
      _
    $region29: #{net3_forward.4} parent=1 // pred_fallthru
      _
    // Predicated region
    $region30: #{net3_forward.4} parent=1 // pred_check
      _
    $region31: #{net3_forward.4} parent=1 // pred_check_branch
      %40 = sbr.rel (0) target = $region33
    $region32: #{net3_forward.4} parent=1 // pred_region
      _
    $region33: #{net3_forward.4} parent=1 // pred_fallthru
      _
    // Predicated region
    $region34: #{net3_forward.4} parent=1 // pred_check
      _
    $region35: #{net3_forward.4} parent=1 // pred_check_branch
      %42 = sbr.rel (0) target = $region37
    $region36: #{net3_forward.4} parent=1 // pred_region
      _
    $region37: #{net3_forward.4} parent=1 // pred_fallthru
      _
    // Predicated region
    $region38: #{net3_forward.4} parent=1 // pred_check
      _
    $region39: #{net3_forward.4} parent=1 // pred_check_branch
      %44 = sbr.rel (0) target = $region41
    $region40: #{net3_forward.4} parent=1 // pred_region
      %45 = dma.done [#allocation3], 2048
    $region41: #{net3_forward.4} parent=1 // pred_fallthru
      _
    %v46 = vld [vmem:[%s0] sm:$0x3]
    %v47 = vld [vmem:[%s1] sm:$0xff]
    %v48 = vld [vmem:[%s1 + $0x8] sm:$0xff]
    %v49 = vld [vmem:[%s2] sm:$0x1]
    %v51 = vlaneseq
    %v52 = vshrl.u32 %v51, 7
    %v53 = vsub.s32 0, %v52
    %v54 = vrot.slane %v49, %v53
    %vm56 = vcmask 130048
    %v58 = vsel %vm56, %v46, 0
    %60 = vmatprep.subr.mxu0 0.0
    %61 = vmatpush1.msra.mxu0 %v47
    %62 = vmatprep.subr.mxu0 0.0
    %63 = vmatpush1.msra.mxu0 %v48
    %64 = vmatprep.subr.mxu0 0.0
    %65 = vmatpush1.msra.mxu0 0.0
    %66 = vmatprep.subr.mxu0 0.0
    %67 = vmatpush1.msra.mxu0 0.0
    %68 = vmatprep.subr.mxu0 0.0
    %69 = vmatpush1.msra.mxu0 0.0
    %70 = vmatprep.subr.mxu0 0.0
    %71 = vmatpush1.msra.mxu0 0.0
    %72 = vmatprep.subr.mxu0 0.0
    %73 = vmatpush1.msra.mxu0 0.0
    %74 = vmatprep.subr.mxu0 0.0
    %75 = vmatpush1.msra.mxu0 0.0
    %76 = vmatprep.subr.mxu0 0.0
    %77 = vmatpush1.msra.mxu0 0.0
    %78 = vmatprep.subr.mxu0 0.0
    %79 = vmatpush1.msra.mxu0 0.0
    %80 = vmatprep.subr.mxu0 0.0
    %81 = vmatpush1.msra.mxu0 0.0
    %82 = vmatprep.subr.mxu0 0.0
    %83 = vmatpush1.msra.mxu0 0.0
    %84 = vmatprep.subr.mxu0 0.0
    %85 = vmatpush1.msra.mxu0 0.0
    %86 = vmatprep.subr.mxu0 0.0
    %87 = vmatpush1.msra.mxu0 0.0
    %88 = vmatprep.subr.mxu0 0.0
    %89 = vmatpush1.msra.mxu0 0.0
    %90 = vmatprep.subr.mxu0 0.0
    %91 = vmatpush1.msra.mxu0 0.0
    %92 = vmatprep.subr.mxu0 0.0
    %93 = vmatpush1.msra.mxu0 0.0
    %94 = vmatprep.subr.mxu0 0.0
    %95 = vmatpush1.msra.mxu0 0.0
    %96 = vmatprep.subr.mxu0 0.0
    %97 = vmatpush1.msra.mxu0 0.0
    %98 = vmatprep.subr.mxu0 0.0
    %99 = vmatpush1.msra.mxu0 0.0
    %100 = vmatprep.subr.mxu0 0.0
    %101 = vmatpush1.msra.mxu0 0.0
    %102 = vmatprep.subr.mxu0 0.0
    %103 = vmatpush1.msra.mxu0 0.0
    %104 = vmatprep.subr.mxu0 0.0
    %105 = vmatpush1.msra.mxu0 0.0
    %106 = vmatprep.subr.mxu0 0.0
    %107 = vmatpush1.msra.mxu0 0.0
    %108 = vmatprep.subr.mxu0 0.0
    %109 = vmatpush1.msra.mxu0 0.0
    %110 = vmatprep.subr.mxu0 0.0
    %111 = vmatpush1.msra.mxu0 0.0
    %112 = vmatprep.subr.mxu0 0.0
    %113 = vmatpush1.msra.mxu0 0.0
    %114 = vmatprep.subr.mxu0 0.0
    %115 = vmatpush1.msra.mxu0 0.0
    %116 = vmatprep.subr.mxu0 0.0
    %117 = vmatpush1.msra.mxu0 0.0
    %118 = vmatprep.subr.mxu0 0.0
    %119 = vmatpush1.msra.mxu0 0.0
    %120 = vmatprep.subr.mxu0 0.0
    %121 = vmatpush1.msra.mxu0 0.0
    %122 = vmatprep.subr.mxu0 0.0
    %123 = vmatpush1.msra.mxu0 0.0
    %124 = vmatprep.mubr.f32.mxu0 0.0
    %125 = vmatmul.mubr.f32.gmra.mrb[0].mxu0 %v58
    %v126 = vpop.f32.mrb[0].mxu0
    %v127 = vadd.f32 %v54, %v126
    %v128 = vpop.f32.mrb[0].mxu0
    %129 = vdwg.mxu0
    %v130 = vmul.f32 %v127, 0.5
    %v131 = vmul.f32 %v127, 0.70710677
    %v132 = vand.u32 2147483647, %v131
    %v133 = vmul.f32 %v132, 0.3275911
    %v134 = vadd.f32 %v133, 1.0
    %v135 = vrcp.pop %v134
    %v136 = vmul.f32 %v135, 1.0614054
    %v137 = vadd.f32 %v136, -1.4531521
    %v138 = vmul.f32 %v137, %v135
    %v139 = vadd.f32 %v138, 1.4214138
    %v140 = vmul.f32 %v139, %v135
    %v141 = vadd.f32 %v140, -0.28449672
    %v142 = vmul.f32 %v141, %v135
    %v143 = vadd.f32 %v142, 0.2548296
    %v144 = vmul.f32 %v143, %v135
    %v145 = vsub.f32 0.0, %v132
    %v146 = vmul.f32 %v145, %v132
    %v147 = vmul.f32 %v146, 1.442695
    %v148 = vpow.pop %v147
    %v149 = vmul.f32 %v144, %v148
    %v150 = vsub.f32 1.0, %v149
    %vm151 = vcmp.ge.f32.partialorder %v131, 0.0
    %v152 = vsub.f32 0.0, %v150
    %v153 = vsel %vm151, %v150, %v152
    %v154 = vadd.f32 %v153, 1.0
    %v155 = vmul.f32 %v130, %v154
    %v156 = vld [vmem:[%s3] sm:$0x1]
    %v157 = vld [vmem:[%s4] sm:$0x1]
    %vm158 = vcmask 254976
    %v159 = vsel %vm158, %v155, 0.0
    %v160 = vrot.slane %v159, 4
    %v161 = vadd.f32 %v159, %v160
    %v162 = vrot.slane %v161, 2
    %v163 = vadd.f32 %v161, %v162
    %v164 = vrot.slane %v163, 1
    %v165 = vadd.f32 %v163, %v164
    %v166 = vrcp.pop 2.0
    %v167 = vmul.f32 %v165, %v166
    %v168 = vsub.f32 %v155, %v167
    %v169 = vmul.f32 %v168, %v168
    %v170 = vsel %vm158, %v169, 0.0
    %v171 = vrot.slane %v170, 4
    %v172 = vadd.f32 %v170, %v171
    %v173 = vrot.slane %v172, 2
    %v174 = vadd.f32 %v172, %v173
    %v175 = vrot.slane %v174, 1
    %v176 = vadd.f32 %v174, %v175
    %v177 = vmul.f32 %v176, %v166
    %v178 = vadd.f32 %v177, 1e-05
    %v179 = vrsqrt.pop %v178
    %v180 = vmul.f32 %v168, %v179
    %v182 = vlaneseq
    %v183 = vshrl.u32 %v182, 7
    %v184 = vsub.s32 0, %v183
    %v185 = vrot.slane %v156, %v184
    %v187 = vmul.f32 %v180, %v185
    %v189 = vlaneseq
    %v190 = vshrl.u32 %v189, 7
    %v191 = vsub.s32 0, %v190
    %v192 = vrot.slane %v157, %v191
    %v194 = vadd.f32 %v187, %v192
    %v195 = vld [vmem:[#allocation2] sm:$0xff]
    %v196 = vld [vmem:[#allocation2 + $0x8] sm:$0xff]
    %v197 = vld [vmem:[#allocation2 + $0x10] sm:$0xff]
    %v198 = vld [vmem:[#allocation2 + $0x18] sm:$0xff]
    %v199 = vld [vmem:[#allocation2 + $0x20] sm:$0xff]
    %v200 = vld [vmem:[#allocation2 + $0x28] sm:$0xff]
    %v201 = vld [vmem:[#allocation2 + $0x30] sm:$0xff]
    %v202 = vld [vmem:[#allocation2 + $0x38] sm:$0xff]
    %v203 = vld [vmem:[#allocation2 + $0x40] sm:$0xff]
    %v204 = vld [vmem:[#allocation2 + $0x48] sm:$0xff]
    %v205 = vld [vmem:[#allocation2 + $0x50] sm:$0xff]
    %v206 = vld [vmem:[#allocation2 + $0x58] sm:$0xff]
    %v207 = vld [vmem:[#allocation2 + $0x60] sm:$0xff]
    %v208 = vld [vmem:[#allocation2 + $0x68] sm:$0xff]
    %v209 = vld [vmem:[#allocation2 + $0x70] sm:$0xff]
    %v210 = vld [vmem:[#allocation2 + $0x78] sm:$0xff]
    %v211 = vld [vmem:[%s6] sm:$0xf]
    %v213 = vlaneseq
    %v214 = vshrl.u32 %v213, 7
    %v215 = vsub.s32 0, %v214
    %v216 = vrot.slane %v211, %v215
    %v217 = vlaneseq
    %v218 = vshrl.u32 %v217, 7
    %v219 = vsub.s32 1, %v218
    %v220 = vrot.slane %v211, %v219
    %v221 = vlaneseq
    %v222 = vshrl.u32 %v221, 7
    %v223 = vsub.s32 2, %v222
    %v224 = vrot.slane %v211, %v223
    %v225 = vlaneseq
    %v226 = vshrl.u32 %v225, 7
    %v227 = vsub.s32 3, %v226
    %v228 = vrot.slane %v211, %v227
    %vm233 = vcmask 261120
    %v235 = vsel %vm233, %v194, 0
    %237 = vmatprep.subr.mxu0 %v196
    %238 = vmatpush1.msra.mxu0 %v195
    %239 = vmatprep.subr.mxu0 %v200
    %240 = vmatpush1.msra.mxu0 %v199
    %241 = vmatprep.subr.mxu0 %v204
    %242 = vmatpush1.msra.mxu0 %v203
    %243 = vmatprep.subr.mxu0 %v208
    %244 = vmatpush1.msra.mxu0 %v207
    %245 = vmatprep.subr.mxu0 0.0
    %246 = vmatpush1.msra.mxu0 0.0
    %247 = vmatprep.subr.mxu0 0.0
    %248 = vmatpush1.msra.mxu0 0.0
    %249 = vmatprep.subr.mxu0 0.0
    %250 = vmatpush1.msra.mxu0 0.0
    %251 = vmatprep.subr.mxu0 0.0
    %252 = vmatpush1.msra.mxu0 0.0
    %253 = vmatprep.subr.mxu0 0.0
    %254 = vmatpush1.msra.mxu0 0.0
    %255 = vmatprep.subr.mxu0 0.0
    %256 = vmatpush1.msra.mxu0 0.0
    %257 = vmatprep.subr.mxu0 0.0
    %258 = vmatpush1.msra.mxu0 0.0
    %259 = vmatprep.subr.mxu0 0.0
    %260 = vmatpush1.msra.mxu0 0.0
    %261 = vmatprep.subr.mxu0 0.0
    %262 = vmatpush1.msra.mxu0 0.0
    %263 = vmatprep.subr.mxu0 0.0
    %264 = vmatpush1.msra.mxu0 0.0
    %265 = vmatprep.subr.mxu0 0.0
    %266 = vmatpush1.msra.mxu0 0.0
    %267 = vmatprep.subr.mxu0 0.0
    %268 = vmatpush1.msra.mxu0 0.0
    %269 = vmatprep.subr.mxu0 0.0
    %270 = vmatpush1.msra.mxu0 0.0
    %271 = vmatprep.subr.mxu0 0.0
    %272 = vmatpush1.msra.mxu0 0.0
    %273 = vmatprep.subr.mxu0 0.0
    %274 = vmatpush1.msra.mxu0 0.0
    %275 = vmatprep.subr.mxu0 0.0
    %276 = vmatpush1.msra.mxu0 0.0
    %277 = vmatprep.subr.mxu0 0.0
    %278 = vmatpush1.msra.mxu0 0.0
    %279 = vmatprep.subr.mxu0 0.0
    %280 = vmatpush1.msra.mxu0 0.0
    %281 = vmatprep.subr.mxu0 0.0
    %282 = vmatpush1.msra.mxu0 0.0
    %283 = vmatprep.subr.mxu0 0.0
    %284 = vmatpush1.msra.mxu0 0.0
    %285 = vmatprep.subr.mxu0 0.0
    %286 = vmatpush1.msra.mxu0 0.0
    %287 = vmatprep.subr.mxu0 0.0
    %288 = vmatpush1.msra.mxu0 0.0
    %289 = vmatprep.subr.mxu0 0.0
    %290 = vmatpush1.msra.mxu0 0.0
    %291 = vmatprep.subr.mxu0 0.0
    %292 = vmatpush1.msra.mxu0 0.0
    %293 = vmatprep.subr.mxu0 0.0
    %294 = vmatpush1.msra.mxu0 0.0
    %295 = vmatprep.subr.mxu0 0.0
    %296 = vmatpush1.msra.mxu0 0.0
    %297 = vmatprep.subr.mxu0 0.0
    %298 = vmatpush1.msra.mxu0 0.0
    %299 = vmatprep.subr.mxu0 0.0
    %300 = vmatpush1.msra.mxu0 0.0
    %301 = vmatprep.mubr.f32.mxu0 0.0
    %302 = vmatmul.mubr.f32.gmra.mrb[0].mxu0 %v235
    %v303 = vpop.f32.mrb[0].mxu0
    %v304 = vadd.f32 %v216, %v303
    %v305 = vpop.f32.mrb[0].mxu0
    %v306 = vadd.f32 %v220, %v305
    %307 = vdwg.mxu0
    %308 = vmatprep.subr.mxu0 %v198
    %309 = vmatpush1.msra.mxu0 %v197
    %310 = vmatprep.subr.mxu0 %v202
    %311 = vmatpush1.msra.mxu0 %v201
    %312 = vmatprep.subr.mxu0 %v206
    %313 = vmatpush1.msra.mxu0 %v205
    %314 = vmatprep.subr.mxu0 %v210
    %315 = vmatpush1.msra.mxu0 %v209
    %316 = vmatprep.subr.mxu0 0.0
    %317 = vmatpush1.msra.mxu0 0.0
    %318 = vmatprep.subr.mxu0 0.0
    %319 = vmatpush1.msra.mxu0 0.0
    %320 = vmatprep.subr.mxu0 0.0
    %321 = vmatpush1.msra.mxu0 0.0
    %322 = vmatprep.subr.mxu0 0.0
    %323 = vmatpush1.msra.mxu0 0.0
    %324 = vmatprep.subr.mxu0 0.0
    %325 = vmatpush1.msra.mxu0 0.0
    %326 = vmatprep.subr.mxu0 0.0
    %327 = vmatpush1.msra.mxu0 0.0
    %328 = vmatprep.subr.mxu0 0.0
    %329 = vmatpush1.msra.mxu0 0.0
    %330 = vmatprep.subr.mxu0 0.0
    %331 = vmatpush1.msra.mxu0 0.0
    %332 = vmatprep.subr.mxu0 0.0
    %333 = vmatpush1.msra.mxu0 0.0
    %334 = vmatprep.subr.mxu0 0.0
    %335 = vmatpush1.msra.mxu0 0.0
    %336 = vmatprep.subr.mxu0 0.0
    %337 = vmatpush1.msra.mxu0 0.0
    %338 = vmatprep.subr.mxu0 0.0
    %339 = vmatpush1.msra.mxu0 0.0
    %340 = vmatprep.subr.mxu0 0.0
    %341 = vmatpush1.msra.mxu0 0.0
    %342 = vmatprep.subr.mxu0 0.0
    %343 = vmatpush1.msra.mxu0 0.0
    %344 = vmatprep.subr.mxu0 0.0
    %345 = vmatpush1.msra.mxu0 0.0
    %346 = vmatprep.subr.mxu0 0.0
    %347 = vmatpush1.msra.mxu0 0.0
    %348 = vmatprep.subr.mxu0 0.0
    %349 = vmatpush1.msra.mxu0 0.0
    %350 = vmatprep.subr.mxu0 0.0
    %351 = vmatpush1.msra.mxu0 0.0
    %352 = vmatprep.subr.mxu0 0.0
    %353 = vmatpush1.msra.mxu0 0.0
    %354 = vmatprep.subr.mxu0 0.0
    %355 = vmatpush1.msra.mxu0 0.0
    %356 = vmatprep.subr.mxu0 0.0
    %357 = vmatpush1.msra.mxu0 0.0
    %358 = vmatprep.subr.mxu0 0.0
    %359 = vmatpush1.msra.mxu0 0.0
    %360 = vmatprep.subr.mxu0 0.0
    %361 = vmatpush1.msra.mxu0 0.0
    %362 = vmatprep.subr.mxu0 0.0
    %363 = vmatpush1.msra.mxu0 0.0
    %364 = vmatprep.subr.mxu0 0.0
    %365 = vmatpush1.msra.mxu0 0.0
    %366 = vmatprep.subr.mxu0 0.0
    %367 = vmatpush1.msra.mxu0 0.0
    %368 = vmatprep.subr.mxu0 0.0
    %369 = vmatpush1.msra.mxu0 0.0
    %370 = vmatprep.subr.mxu0 0.0
    %371 = vmatpush1.msra.mxu0 0.0
    %372 = vmatprep.mubr.f32.mxu0 0.0
    %373 = vmatmul.mubr.f32.gmra.mrb[0].mxu0 %v235
    %v374 = vpop.f32.mrb[0].mxu0
    %v375 = vadd.f32 %v224, %v374
    %v376 = vpop.f32.mrb[0].mxu0
    %v377 = vadd.f32 %v228, %v376
    %378 = vdwg.mxu0
    %v379 = vmul.f32 %v304, 0.5
    %v380 = vmul.f32 %v306, 0.5
    %v381 = vmul.f32 %v375, 0.5
    %v382 = vmul.f32 %v377, 0.5
    %v383 = vmul.f32 %v304, 0.70710677
    %v384 = vmul.f32 %v306, 0.70710677
    %v385 = vmul.f32 %v375, 0.70710677
    %v386 = vmul.f32 %v377, 0.70710677
    %v387 = vand.u32 2147483647, %v383
    %v388 = vand.u32 2147483647, %v384
    %v389 = vand.u32 2147483647, %v385
    %v390 = vand.u32 2147483647, %v386
    %v391 = vmul.f32 %v387, 0.3275911
    %v392 = vmul.f32 %v388, 0.3275911
    %v393 = vmul.f32 %v389, 0.3275911
    %v394 = vmul.f32 %v390, 0.3275911
    %v395 = vadd.f32 %v391, 1.0
    %v396 = vadd.f32 %v392, 1.0
    %v397 = vadd.f32 %v393, 1.0
    %v398 = vadd.f32 %v394, 1.0
    %v399 = vrcp.pop %v395
    %v400 = vrcp.pop %v396
    %v401 = vrcp.pop %v397
    %v402 = vrcp.pop %v398
    %v403 = vmul.f32 %v399, 1.0614054
    %v404 = vmul.f32 %v400, 1.0614054
    %v405 = vmul.f32 %v401, 1.0614054
    %v406 = vmul.f32 %v402, 1.0614054
    %v407 = vadd.f32 %v403, -1.4531521
    %v408 = vadd.f32 %v404, -1.4531521
    %v409 = vadd.f32 %v405, -1.4531521
    %v410 = vadd.f32 %v406, -1.4531521
    %v411 = vmul.f32 %v407, %v399
    %v412 = vmul.f32 %v408, %v400
    %v413 = vmul.f32 %v409, %v401
    %v414 = vmul.f32 %v410, %v402
    %v415 = vadd.f32 %v411, 1.4214138
    %v416 = vadd.f32 %v412, 1.4214138
    %v417 = vadd.f32 %v413, 1.4214138
    %v418 = vadd.f32 %v414, 1.4214138
    %v419 = vmul.f32 %v415, %v399
    %v420 = vmul.f32 %v416, %v400
    %v421 = vmul.f32 %v417, %v401
    %v422 = vmul.f32 %v418, %v402
    %v423 = vadd.f32 %v419, -0.28449672
    %v424 = vadd.f32 %v420, -0.28449672
    %v425 = vadd.f32 %v421, -0.28449672
    %v426 = vadd.f32 %v422, -0.28449672
    %v427 = vmul.f32 %v423, %v399
    %v428 = vmul.f32 %v424, %v400
    %v429 = vmul.f32 %v425, %v401
    %v430 = vmul.f32 %v426, %v402
    %v431 = vadd.f32 %v427, 0.2548296
    %v432 = vadd.f32 %v428, 0.2548296
    %v433 = vadd.f32 %v429, 0.2548296
    %v434 = vadd.f32 %v430, 0.2548296
    %v435 = vmul.f32 %v431, %v399
    %v436 = vmul.f32 %v432, %v400
    %v437 = vmul.f32 %v433, %v401
    %v438 = vmul.f32 %v434, %v402
    %v439 = vsub.f32 0.0, %v387
    %v440 = vsub.f32 0.0, %v388
    %v441 = vsub.f32 0.0, %v389
    %v442 = vsub.f32 0.0, %v390
    %v443 = vmul.f32 %v439, %v387
    %v444 = vmul.f32 %v440, %v388
    %v445 = vmul.f32 %v441, %v389
    %v446 = vmul.f32 %v442, %v390
    %v447 = vmul.f32 %v443, 1.442695
    %v448 = vpow.pop %v447
    %v449 = vmul.f32 %v444, 1.442695
    %v450 = vpow.pop %v449
    %v451 = vmul.f32 %v445, 1.442695
    %v452 = vpow.pop %v451
    %v453 = vmul.f32 %v446, 1.442695
    %v454 = vpow.pop %v453
    %v455 = vmul.f32 %v435, %v448
    %v456 = vmul.f32 %v436, %v450
    %v457 = vmul.f32 %v437, %v452
    %v458 = vmul.f32 %v438, %v454
    %v459 = vsub.f32 1.0, %v455
    %v460 = vsub.f32 1.0, %v456
    %v461 = vsub.f32 1.0, %v457
    %v462 = vsub.f32 1.0, %v458
    %vm463 = vcmp.ge.f32.partialorder %v383, 0.0
    %vm464 = vcmp.ge.f32.partialorder %v384, 0.0
    %vm465 = vcmp.ge.f32.partialorder %v385, 0.0
    %vm466 = vcmp.ge.f32.partialorder %v386, 0.0
    %v467 = vsub.f32 0.0, %v459
    %v468 = vsub.f32 0.0, %v460
    %v469 = vsub.f32 0.0, %v461
    %v470 = vsub.f32 0.0, %v462
    %v471 = vsel %vm463, %v459, %v467
    %v472 = vsel %vm464, %v460, %v468
    %v473 = vsel %vm465, %v461, %v469
    %v474 = vsel %vm466, %v462, %v470
    %v475 = vadd.f32 %v471, 1.0
    %v476 = vadd.f32 %v472, 1.0
    %v477 = vadd.f32 %v473, 1.0
    %v478 = vadd.f32 %v474, 1.0
    %v479 = vmul.f32 %v379, %v475
    %v480 = vmul.f32 %v380, %v476
    %v481 = vmul.f32 %v381, %v477
    %v482 = vmul.f32 %v382, %v478
    %v483 = vld [vmem:[%s7] sm:$0xf]
    %v484 = vld [vmem:[%s8] sm:$0xf]
    %vm485 = vcmask 1041408
    %v486 = vsel %vm485, %v479, 0.0
    %v487 = vrot.slane %v486, 4
    %v488 = vadd.f32 %v486, %v487
    %v489 = vrot.slane %v488, 2
    %v490 = vadd.f32 %v488, %v489
    %v491 = vrot.slane %v490, 1
    %v492 = vadd.f32 %v490, %v491
    %v493 = vsel %vm485, %v480, 0.0
    %v494 = vrot.slane %v493, 4
    %v495 = vadd.f32 %v493, %v494
    %v496 = vrot.slane %v495, 2
    %v497 = vadd.f32 %v495, %v496
    %v498 = vrot.slane %v497, 1
    %v499 = vadd.f32 %v497, %v498
    %v500 = vsel %vm485, %v481, 0.0
    %v501 = vrot.slane %v500, 4
    %v502 = vadd.f32 %v500, %v501
    %v503 = vrot.slane %v502, 2
    %v504 = vadd.f32 %v502, %v503
    %v505 = vrot.slane %v504, 1
    %v506 = vadd.f32 %v504, %v505
    %vm507 = vcmask 123904
    %v508 = vsel %vm507, %v482, 0.0
    %v509 = vrot.slane %v508, 4
    %v510 = vadd.f32 %v508, %v509
    %v511 = vrot.slane %v510, 2
    %v512 = vadd.f32 %v510, %v511
    %v513 = vrot.slane %v512, 1
    %v514 = vadd.f32 %v512, %v513
    %v515 = vmul.f32 %v492, %v166
    %v516 = vmul.f32 %v499, %v166
    %v517 = vmul.f32 %v506, %v166
    %v518 = vmul.f32 %v514, %v166
    %v519 = vsub.f32 %v479, %v515
    %v520 = vsub.f32 %v480, %v516
    %v521 = vsub.f32 %v481, %v517
    %v522 = vsub.f32 %v482, %v518
    %v523 = vmul.f32 %v519, %v519
    %v524 = vmul.f32 %v520, %v520
    %v525 = vmul.f32 %v521, %v521
    %v526 = vmul.f32 %v522, %v522
    %v527 = vsel %vm485, %v523, 0.0
    %v528 = vrot.slane %v527, 4
    %v529 = vadd.f32 %v527, %v528
    %v530 = vrot.slane %v529, 2
    %v531 = vadd.f32 %v529, %v530
    %v532 = vrot.slane %v531, 1
    %v533 = vadd.f32 %v531, %v532
    %v534 = vsel %vm485, %v524, 0.0
    %v535 = vrot.slane %v534, 4
    %v536 = vadd.f32 %v534, %v535
    %v537 = vrot.slane %v536, 2
    %v538 = vadd.f32 %v536, %v537
    %v539 = vrot.slane %v538, 1
    %v540 = vadd.f32 %v538, %v539
    %v541 = vsel %vm485, %v525, 0.0
    %v542 = vrot.slane %v541, 4
    %v543 = vadd.f32 %v541, %v542
    %v544 = vrot.slane %v543, 2
    %v545 = vadd.f32 %v543, %v544
    %v546 = vrot.slane %v545, 1
    %v547 = vadd.f32 %v545, %v546
    %v548 = vsel %vm507, %v526, 0.0
    %v549 = vrot.slane %v548, 4
    %v550 = vadd.f32 %v548, %v549
    %v551 = vrot.slane %v550, 2
    %v552 = vadd.f32 %v550, %v551
    %v553 = vrot.slane %v552, 1
    %v554 = vadd.f32 %v552, %v553
    %v555 = vmul.f32 %v533, %v166
    %v556 = vmul.f32 %v540, %v166
    %v557 = vmul.f32 %v547, %v166
    %v558 = vmul.f32 %v554, %v166
    %v559 = vadd.f32 %v555, 1e-05
    %v560 = vadd.f32 %v556, 1e-05
    %v561 = vadd.f32 %v557, 1e-05
    %v562 = vadd.f32 %v558, 1e-05
    %v563 = vrsqrt.pop %v559
    %v564 = vrsqrt.pop %v560
    %v565 = vrsqrt.pop %v561
    %v566 = vrsqrt.pop %v562
    %v567 = vmul.f32 %v519, %v563
    %v568 = vmul.f32 %v520, %v564
    %v569 = vmul.f32 %v521, %v565
    %v570 = vmul.f32 %v522, %v566
    %v572 = vlaneseq
    %v573 = vshrl.u32 %v572, 7
    %v574 = vsub.s32 0, %v573
    %v575 = vrot.slane %v483, %v574
    %v576 = vlaneseq
    %v577 = vshrl.u32 %v576, 7
    %v578 = vsub.s32 1, %v577
    %v579 = vrot.slane %v483, %v578
    %v580 = vlaneseq
    %v581 = vshrl.u32 %v580, 7
    %v582 = vsub.s32 2, %v581
    %v583 = vrot.slane %v483, %v582
    %v584 = vlaneseq
    %v585 = vshrl.u32 %v584, 7
    %v586 = vsub.s32 3, %v585
    %v587 = vrot.slane %v483, %v586
    %v592 = vmul.f32 %v567, %v575
    %v593 = vmul.f32 %v568, %v579
    %v594 = vmul.f32 %v569, %v583
    %v595 = vmul.f32 %v570, %v587
    %v597 = vlaneseq
    %v598 = vshrl.u32 %v597, 7
    %v599 = vsub.s32 0, %v598
    %v600 = vrot.slane %v484, %v599
    %v601 = vlaneseq
    %v602 = vshrl.u32 %v601, 7
    %v603 = vsub.s32 1, %v602
    %v604 = vrot.slane %v484, %v603
    %v605 = vlaneseq
    %v606 = vshrl.u32 %v605, 7
    %v607 = vsub.s32 2, %v606
    %v608 = vrot.slane %v484, %v607
    %v609 = vlaneseq
    %v610 = vshrl.u32 %v609, 7
    %v611 = vsub.s32 3, %v610
    %v612 = vrot.slane %v484, %v611
    %v617 = vadd.f32 %v592, %v600
    %v618 = vadd.f32 %v593, %v604
    %v619 = vadd.f32 %v594, %v608
    %v620 = vadd.f32 %v595, %v612
    %v625 = vcombine.low %v617, %v618
    %v626 = vcombine.low %v619, %v620
    %v628 = vunpack.c.l.s4 1983009808
    %v629 = vunpack.c.0.s8 %v628
    %v630 = vlaneseq
    %v631 = vshrl.u32 %v630, 7
    %v632 = vsub.s32 %v629, %v631
    %v633 = vrot.slane %v625, %v632
    %v635 = vunpack.c.l.s4 1983009808
    %v636 = vunpack.c.0.s8 %v635
    %v637 = vlaneseq
    %v638 = vshrl.u32 %v637, 7
    %v639 = vsub.s32 %v636, %v638
    %v640 = vrot.slane %v626, %v639
    %v641 = vcombine.low %v633, %v640
    %vm643 = vcmask 1043458
    %vm644 = vmor %vm643, %vm485
    %vm645 = vcmask 1045508
    %vm646 = vmor %vm645, %vm644
    %vm647 = vcmask 130054
    %vm648 = vmor %vm647, %vm646
    %649 = vst.msk [vmem:[%s9] sm:$0xff] %vm648, %v641
    // Predicated region
    $region42: #{net3_forward.4} parent=1 // pred_check
      _
    $region43: #{net3_forward.4} parent=1 // pred_check_branch
      %651 = sbr.rel (0) target = $region45
    $region44: #{net3_forward.4} parent=1 // pred_region
      _
    $region45: #{net3_forward.4} parent=1 // pred_fallthru
      _
    // Predicated region
    $region46: #{net3_forward.4} parent=1 // pred_check
      _
    $region47: #{net3_forward.4} parent=1 // pred_check_branch
      %653 = sbr.rel (0) target = $region49
    $region48: #{net3_forward.4} parent=1 // pred_region
      _
    $region49: #{net3_forward.4} parent=1 // pred_fallthru
      _
    %654 = vsyncpa [#allocation3], 1

// kernel: net3_forward.5
$region0: #{net3_forward.5}
  #allocation0 [shape = 'u32[]', space=smem, size = 0x4, offset = 0x4, fixed_abs, tag = 'smem constant byte address 0x4 - core index']
  #allocation1 [shape = 'u32[144,128]{1,0:T(1,128)}', space=vmem, size = 0x12000, scoped, tag = 'internal scratch']
  %s0 = inlined_call_operand.vmem [shape: f32[144,98], index: 0, kind: input, shape index: {}]
  %s1 = inlined_call_operand.vmem [shape: f32[8,144], index: 1, kind: input, shape index: {}]
  %s2 = inlined_call_operand.vmem [shape: f32[8,1], index: 2, kind: input, shape index: {}]
  %s3 = inlined_call_operand.vmem [shape: f32[8,1], index: 3, kind: input, shape index: {}]
  %s4 = inlined_call_operand.vmem [shape: f32[8,1], index: 4, kind: input, shape index: {}]
  %s5 = inlined_call_operand.vmem [shape: f32[8,98], index: 5, kind: output, shape index: {}]
  %s6 = sld [smem:[#allocation0]]
  $region30: #{net3_forward.5} parent=0
    _
  %s8 = ssub.s32 1, %s6
  %s9 = scalar_select 0, %s8, %s6
  // Predicated region
  $region2: #{net3_forward.5} parent=0 // pred_check
    _
  $region3: #{net3_forward.5} parent=0 // pred_check_branch
    %11 = sbr.rel (0) target = $region5
  $region4: #{net3_forward.5} parent=0 // pred_region
    _
  $region5: #{net3_forward.5} parent=0 // pred_fallthru
    _
  // Predicated region
  $region6: #{net3_forward.5} parent=0 // pred_check
    _
  $region7: #{net3_forward.5} parent=0 // pred_check_branch
    %13 = sbr.rel (0) target = $region9
  $region8: #{net3_forward.5} parent=0 // pred_region
    _
  $region9: #{net3_forward.5} parent=0 // pred_fallthru
    _
  // Predicated region
  $region10: #{net3_forward.5} parent=0 // pred_check
    _
  $region11: #{net3_forward.5} parent=0 // pred_check_branch
    %15 = sbr.rel (0) target = $region13
  $region12: #{net3_forward.5} parent=0 // pred_region
    _
  $region13: #{net3_forward.5} parent=0 // pred_fallthru
    _
  // Predicated region
  $region14: #{net3_forward.5} parent=0 // pred_check
    _
  $region15: #{net3_forward.5} parent=0 // pred_check_branch
    %17 = sbr.rel (0) target = $region17
  $region16: #{net3_forward.5} parent=0 // pred_region
    _
  $region17: #{net3_forward.5} parent=0 // pred_fallthru
    _
  // Predicated region
  $region18: #{net3_forward.5} parent=0 // pred_check
    _
  $region19: #{net3_forward.5} parent=0 // pred_check_branch
    %19 = sbr.rel (0) target = $region21
  $region20: #{net3_forward.5} parent=0 // pred_region
    _
  $region21: #{net3_forward.5} parent=0 // pred_fallthru
    _
  %v20 = vld [vmem:[%s1] sm:$0xff]
  %v21 = vld [vmem:[%s1 + $0x8] sm:$0xff]
  %v22 = vld [vmem:[%s0] sm:$0xff]
  %v23 = vld [vmem:[%s0 + $0x8] sm:$0xff]
  %v24 = vld [vmem:[%s0 + $0x10] sm:$0xff]
  %v25 = vld [vmem:[%s0 + $0x18] sm:$0xff]
  %v26 = vld [vmem:[%s0 + $0x20] sm:$0xff]
  %v27 = vld [vmem:[%s0 + $0x28] sm:$0xff]
  %v28 = vld [vmem:[%s0 + $0x30] sm:$0xff]
  %v29 = vld [vmem:[%s0 + $0x38] sm:$0xff]
  %v30 = vld [vmem:[%s0 + $0x40] sm:$0xff]
  %v31 = vld [vmem:[%s0 + $0x48] sm:$0xff]
  %v32 = vld [vmem:[%s0 + $0x50] sm:$0xff]
  %v33 = vld [vmem:[%s0 + $0x58] sm:$0xff]
  %v34 = vld [vmem:[%s0 + $0x60] sm:$0xff]
  %v35 = vld [vmem:[%s0 + $0x68] sm:$0xff]
  %v36 = vld [vmem:[%s0 + $0x70] sm:$0xff]
  %v37 = vld [vmem:[%s0 + $0x78] sm:$0xff]
  %v38 = vld [vmem:[%s0 + $0x80] sm:$0xff]
  %v39 = vld [vmem:[%s0 + $0x88] sm:$0xff]
  %v40 = vld [vmem:[%s2] sm:$0xff]
  %42 = vset.pattern.permute.xlu0 0
  %43 = vperm.xlu0 %42, %v40
  %v44 = vpop.permute.xlu0 %43
  %vm46 = vcmask 130048
  %v48 = vsel %vm46, %v21, 0
  %50 = vmatprep.subr.mxu0 0.0
  %51 = vmatpush1.msra.mxu0 %v22
  %52 = vmatprep.subr.mxu0 0.0
  %53 = vmatpush1.msra.mxu0 %v23
  %54 = vmatprep.subr.mxu0 0.0
  %55 = vmatpush1.msra.mxu0 %v24
  %56 = vmatprep.subr.mxu0 0.0
  %57 = vmatpush1.msra.mxu0 %v25
  %58 = vmatprep.subr.mxu0 0.0
  %59 = vmatpush1.msra.mxu0 %v26
  %60 = vmatprep.subr.mxu0 0.0
  %61 = vmatpush1.msra.mxu0 %v27
  %62 = vmatprep.subr.mxu0 0.0
  %63 = vmatpush1.msra.mxu0 %v28
  %64 = vmatprep.subr.mxu0 0.0
  %65 = vmatpush1.msra.mxu0 %v29
  %66 = vmatprep.subr.mxu0 0.0
  %67 = vmatpush1.msra.mxu0 %v30
  %68 = vmatprep.subr.mxu0 0.0
  %69 = vmatpush1.msra.mxu0 %v31
  %70 = vmatprep.subr.mxu0 0.0
  %71 = vmatpush1.msra.mxu0 %v32
  %72 = vmatprep.subr.mxu0 0.0
  %73 = vmatpush1.msra.mxu0 %v33
  %74 = vmatprep.subr.mxu0 0.0
  %75 = vmatpush1.msra.mxu0 %v34
  %76 = vmatprep.subr.mxu0 0.0
  %77 = vmatpush1.msra.mxu0 %v35
  %78 = vmatprep.subr.mxu0 0.0
  %79 = vmatpush1.msra.mxu0 %v36
  %80 = vmatprep.subr.mxu0 0.0
  %81 = vmatpush1.msra.mxu0 %v37
  %82 = vmatprep.subr.mxu0 0.0
  %83 = vmatpush1.msra.mxu0 %v38
  %84 = vmatprep.subr.mxu0 0.0
  %85 = vmatpush1.msra.mxu0 %v39
  %86 = vmatprep.subr.mxu0 0.0
  %87 = vmatpush1.msra.mxu0 0.0
  %88 = vmatprep.subr.mxu0 0.0
  %89 = vmatpush1.msra.mxu0 0.0
  %90 = vmatprep.subr.mxu0 0.0
  %91 = vmatpush1.msra.mxu0 0.0
  %92 = vmatprep.subr.mxu0 0.0
  %93 = vmatpush1.msra.mxu0 0.0
  %94 = vmatprep.subr.mxu0 0.0
  %95 = vmatpush1.msra.mxu0 0.0
  %96 = vmatprep.subr.mxu0 0.0
  %97 = vmatpush1.msra.mxu0 0.0
  %98 = vmatprep.subr.mxu0 0.0
  %99 = vmatpush1.msra.mxu0 0.0
  %100 = vmatprep.subr.mxu0 0.0
  %101 = vmatpush1.msra.mxu0 0.0
  %102 = vmatprep.subr.mxu0 0.0
  %103 = vmatpush1.msra.mxu0 0.0
  %104 = vmatprep.subr.mxu0 0.0
  %105 = vmatpush1.msra.mxu0 0.0
  %106 = vmatprep.subr.mxu0 0.0
  %107 = vmatpush1.msra.mxu0 0.0
  %108 = vmatprep.subr.mxu0 0.0
  %109 = vmatpush1.msra.mxu0 0.0
  %110 = vmatprep.subr.mxu0 0.0
  %111 = vmatpush1.msra.mxu0 0.0
  %112 = vmatprep.subr.mxu0 0.0
  %113 = vmatpush1.msra.mxu0 0.0
  %114 = vmatprep.mubr.f32.mxu0 %v48
  %115 = vmatmul.mubr.f32.gmra.mrb[0].mxu0 %v20
  %v116 = vpop.f32.mrb[0].mxu0
  %v117 = vadd.f32 %v44, %v116
  %v118 = vpop.f32.mrb[0].mxu0
  %119 = vdwg.mxu0
  %v120 = vmul.f32 %v117, 0.5
  %v121 = vmul.f32 %v117, 0.70710677
  %v122 = vand.u32 2147483647, %v121
  %v123 = vmul.f32 %v122, 0.3275911
  %v124 = vadd.f32 %v123, 1.0
  %v125 = vrcp.pop %v124
  %v126 = vmul.f32 %v125, 1.0614054
  %v127 = vadd.f32 %v126, -1.4531521
  %v128 = vmul.f32 %v127, %v125
  %v129 = vadd.f32 %v128, 1.4214138
  %v130 = vmul.f32 %v129, %v125
  %v131 = vadd.f32 %v130, -0.28449672
  %v132 = vmul.f32 %v131, %v125
  %v133 = vadd.f32 %v132, 0.2548296
  %v134 = vmul.f32 %v133, %v125
  %v135 = vsub.f32 0.0, %v122
  %v136 = vmul.f32 %v135, %v122
  %v137 = vmul.f32 %v136, 1.442695
  %v138 = vpow.pop %v137
  %v139 = vmul.f32 %v134, %v138
  %v140 = vsub.f32 1.0, %v139
  %vm141 = vcmp.ge.f32.partialorder %v121, 0.0
  %v142 = vsub.f32 0.0, %v140
  %v143 = vsel %vm141, %v140, %v142
  %v144 = vadd.f32 %v143, 1.0
  %v145 = vmul.f32 %v120, %v144
  %v146 = vld [vmem:[%s3] sm:$0xff]
  %v147 = vld [vmem:[%s4] sm:$0xff]
  %vm148 = vcmask 801792
  %v149 = vsel %vm148, %v145, 0.0
  %150 = vadd.xlane.f32.xlu0 %v149
  %v151 = vpop.xlane.xlu0 %150
  %v152 = vrcp.pop 98.0
  %v153 = vmul.f32 %v151, %v152
  %v154 = vsub.f32 %v145, %v153
  %v155 = vmul.f32 %v154, %v154
  %v156 = vsel %vm148, %v155, 0.0
  %157 = vadd.xlane.f32.xlu0 %v156
  %v158 = vpop.xlane.xlu0 %157
  %v159 = vmul.f32 %v158, %v152
  %v160 = vadd.f32 %v159, 1e-05
  %v161 = vrsqrt.pop %v160
  %v162 = vmul.f32 %v154, %v161
  %164 = vset.pattern.permute.xlu0 0
  %165 = vperm.xlu0 %164, %v146
  %v166 = vpop.permute.xlu0 %165
  %v168 = vmul.f32 %v162, %v166
  %170 = vset.pattern.permute.xlu0 0
  %171 = vperm.xlu0 %170, %v147
  %v172 = vpop.permute.xlu0 %171
  %v174 = vadd.f32 %v168, %v172
  %175 = vst.msk [vmem:[%s5] sm:$0xff] %vm148, %v174
  // Predicated region
  $region22: #{net3_forward.5} parent=0 // pred_check
    _
  $region23: #{net3_forward.5} parent=0 // pred_check_branch
    %177 = sbr.rel (0) target = $region25
  $region24: #{net3_forward.5} parent=0 // pred_region
    _
  $region25: #{net3_forward.5} parent=0 // pred_fallthru
    _
  // Predicated region
  $region26: #{net3_forward.5} parent=0 // pred_check
    _
  $region27: #{net3_forward.5} parent=0 // pred_check_branch
    %179 = sbr.rel (0) target = $region29
  $region28: #{net3_forward.5} parent=0 // pred_region
    _
  $region29: #{net3_forward.5} parent=0 // pred_fallthru
    _

// kernel: net3_forward.6
$region0: #{net3_forward.6}
  #allocation0 [shape = 'u32[]', space=smem, size = 0x4, offset = 0x4, fixed_abs, tag = 'smem constant byte address 0x4 - core index']
  #allocation1 [shape = 'u32[144,128]{1,0:T(1,128)}', space=vmem, size = 0x12000, scoped, tag = 'internal scratch']
  %s0 = inlined_call_operand.vmem [shape: f32[128,392], index: 0, kind: input, shape index: {}]
  %s1 = inlined_call_operand.vmem [shape: f32[4,128], index: 1, kind: input, shape index: {}]
  %s2 = inlined_call_operand.vmem [shape: f32[4,1], index: 2, kind: input, shape index: {}]
  %s3 = inlined_call_operand.vmem [shape: f32[4,1], index: 3, kind: input, shape index: {}]
  %s4 = inlined_call_operand.vmem [shape: f32[4,1], index: 4, kind: input, shape index: {}]
  %s5 = inlined_call_operand.vmem [shape: f32[4,392], index: 5, kind: output, shape index: {}]
  %s6 = sld [smem:[#allocation0]]
  $region30: #{net3_forward.6} parent=0
    _
  %s8 = ssub.s32 1, %s6
  %s9 = scalar_select 0, %s8, %s6
  // Predicated region
  $region2: #{net3_forward.6} parent=0 // pred_check
    _
  $region3: #{net3_forward.6} parent=0 // pred_check_branch
    %11 = sbr.rel (0) target = $region5
  $region4: #{net3_forward.6} parent=0 // pred_region
    _
  $region5: #{net3_forward.6} parent=0 // pred_fallthru
    _
  // Predicated region
  $region6: #{net3_forward.6} parent=0 // pred_check
    _
  $region7: #{net3_forward.6} parent=0 // pred_check_branch
    %13 = sbr.rel (0) target = $region9
  $region8: #{net3_forward.6} parent=0 // pred_region
    _
  $region9: #{net3_forward.6} parent=0 // pred_fallthru
    _
  // Predicated region
  $region10: #{net3_forward.6} parent=0 // pred_check
    _
  $region11: #{net3_forward.6} parent=0 // pred_check_branch
    %15 = sbr.rel (0) target = $region13
  $region12: #{net3_forward.6} parent=0 // pred_region
    _
  $region13: #{net3_forward.6} parent=0 // pred_fallthru
    _
  // Predicated region
  $region14: #{net3_forward.6} parent=0 // pred_check
    _
  $region15: #{net3_forward.6} parent=0 // pred_check_branch
    %17 = sbr.rel (0) target = $region17
  $region16: #{net3_forward.6} parent=0 // pred_region
    _
  $region17: #{net3_forward.6} parent=0 // pred_fallthru
    _
  // Predicated region
  $region18: #{net3_forward.6} parent=0 // pred_check
    _
  $region19: #{net3_forward.6} parent=0 // pred_check_branch
    %19 = sbr.rel (0) target = $region21
  $region20: #{net3_forward.6} parent=0 // pred_region
    _
  $region21: #{net3_forward.6} parent=0 // pred_fallthru
    _
  %v20 = vld [vmem:[%s1] sm:$0xf]
  %v21 = vld [vmem:[%s0] sm:$0xff]
  %v22 = vld [vmem:[%s0 + $0x8] sm:$0xff]
  %v23 = vld [vmem:[%s0 + $0x10] sm:$0xff]
  %v24 = vld [vmem:[%s0 + $0x18] sm:$0xff]
  %v25 = vld [vmem:[%s0 + $0x20] sm:$0xff]
  %v26 = vld [vmem:[%s0 + $0x28] sm:$0xff]
  %v27 = vld [vmem:[%s0 + $0x30] sm:$0xff]
  %v28 = vld [vmem:[%s0 + $0x38] sm:$0xff]
  %v29 = vld [vmem:[%s0 + $0x40] sm:$0xff]
  %v30 = vld [vmem:[%s0 + $0x48] sm:$0xff]
  %v31 = vld [vmem:[%s0 + $0x50] sm:$0xff]
  %v32 = vld [vmem:[%s0 + $0x58] sm:$0xff]
  %v33 = vld [vmem:[%s0 + $0x60] sm:$0xff]
  %v34 = vld [vmem:[%s0 + $0x68] sm:$0xff]
  %v35 = vld [vmem:[%s0 + $0x70] sm:$0xff]
  %v36 = vld [vmem:[%s0 + $0x78] sm:$0xff]
  %v37 = vld [vmem:[%s0 + $0x80] sm:$0xff]
  %v38 = vld [vmem:[%s0 + $0x88] sm:$0xff]
  %v39 = vld [vmem:[%s0 + $0x90] sm:$0xff]
  %v40 = vld [vmem:[%s0 + $0x98] sm:$0xff]
  %v41 = vld [vmem:[%s0 + $0xa0] sm:$0xff]
  %v42 = vld [vmem:[%s0 + $0xa8] sm:$0xff]
  %v43 = vld [vmem:[%s0 + $0xb0] sm:$0xff]
  %v44 = vld [vmem:[%s0 + $0xb8] sm:$0xff]
  %v45 = vld [vmem:[%s0 + $0xc0] sm:$0xff]
  %v46 = vld [vmem:[%s0 + $0xc8] sm:$0xff]
  %v47 = vld [vmem:[%s0 + $0xd0] sm:$0xff]
  %v48 = vld [vmem:[%s0 + $0xd8] sm:$0xff]
  %v49 = vld [vmem:[%s0 + $0xe0] sm:$0xff]
  %v50 = vld [vmem:[%s0 + $0xe8] sm:$0xff]
  %v51 = vld [vmem:[%s0 + $0xf0] sm:$0xff]
  %v52 = vld [vmem:[%s0 + $0xf8] sm:$0xff]
  %v53 = vld [vmem:[%s0 + $0x100] sm:$0xff]
  %v54 = vld [vmem:[%s0 + $0x108] sm:$0xff]
  %v55 = vld [vmem:[%s0 + $0x110] sm:$0xff]
  %v56 = vld [vmem:[%s0 + $0x118] sm:$0xff]
  %v57 = vld [vmem:[%s0 + $0x120] sm:$0xff]
  %v58 = vld [vmem:[%s0 + $0x128] sm:$0xff]
  %v59 = vld [vmem:[%s0 + $0x130] sm:$0xff]
  %v60 = vld [vmem:[%s0 + $0x138] sm:$0xff]
  %v61 = vld [vmem:[%s0 + $0x140] sm:$0xff]
  %v62 = vld [vmem:[%s0 + $0x148] sm:$0xff]
  %v63 = vld [vmem:[%s0 + $0x150] sm:$0xff]
  %v64 = vld [vmem:[%s0 + $0x158] sm:$0xff]
  %v65 = vld [vmem:[%s0 + $0x160] sm:$0xff]
  %v66 = vld [vmem:[%s0 + $0x168] sm:$0xff]
  %v67 = vld [vmem:[%s0 + $0x170] sm:$0xff]
  %v68 = vld [vmem:[%s0 + $0x178] sm:$0xff]
  %v69 = vld [vmem:[%s0 + $0x180] sm:$0xff]
  %v70 = vld [vmem:[%s0 + $0x188] sm:$0xff]
  %v71 = vld [vmem:[%s0 + $0x190] sm:$0xff]
  %v72 = vld [vmem:[%s0 + $0x198] sm:$0xff]
  %v73 = vld [vmem:[%s0 + $0x1a0] sm:$0xff]
  %v74 = vld [vmem:[%s0 + $0x1a8] sm:$0xff]
  %v75 = vld [vmem:[%s0 + $0x1b0] sm:$0xff]
  %v76 = vld [vmem:[%s0 + $0x1b8] sm:$0xff]
  %v77 = vld [vmem:[%s0 + $0x1c0] sm:$0xff]
  %v78 = vld [vmem:[%s0 + $0x1c8] sm:$0xff]
  %v79 = vld [vmem:[%s0 + $0x1d0] sm:$0xff]
  %v80 = vld [vmem:[%s0 + $0x1d8] sm:$0xff]
  %v81 = vld [vmem:[%s0 + $0x1e0] sm:$0xff]
  %v82 = vld [vmem:[%s0 + $0x1e8] sm:$0xff]
  %v83 = vld [vmem:[%s0 + $0x1f0] sm:$0xff]
  %v84 = vld [vmem:[%s0 + $0x1f8] sm:$0xff]
  %v85 = vld [vmem:[%s2] sm:$0xf]
  %87 = vset.pattern.permute.xlu0 0
  %88 = vperm.xlu0 %87, %v85
  %v89 = vpop.permute.xlu0 %88
  %91 = vmatprep.subr.mxu0 %v22
  %92 = vmatpush1.msra.mxu0 %v21
  %93 = vmatprep.subr.mxu0 %v26
  %94 = vmatpush1.msra.mxu0 %v25
  %95 = vmatprep.subr.mxu0 %v30
  %96 = vmatpush1.msra.mxu0 %v29
  %97 = vmatprep.subr.mxu0 %v34
  %98 = vmatpush1.msra.mxu0 %v33
  %99 = vmatprep.subr.mxu0 %v38
  %100 = vmatpush1.msra.mxu0 %v37
  %101 = vmatprep.subr.mxu0 %v42
  %102 = vmatpush1.msra.mxu0 %v41
  %103 = vmatprep.subr.mxu0 %v46
  %104 = vmatpush1.msra.mxu0 %v45
  %105 = vmatprep.subr.mxu0 %v50
  %106 = vmatpush1.msra.mxu0 %v49
  %107 = vmatprep.subr.mxu0 %v54
  %108 = vmatpush1.msra.mxu0 %v53
  %109 = vmatprep.subr.mxu0 %v58
  %110 = vmatpush1.msra.mxu0 %v57
  %111 = vmatprep.subr.mxu0 %v62
  %112 = vmatpush1.msra.mxu0 %v61
  %113 = vmatprep.subr.mxu0 %v66
  %114 = vmatpush1.msra.mxu0 %v65
  %115 = vmatprep.subr.mxu0 %v70
  %116 = vmatpush1.msra.mxu0 %v69
  %117 = vmatprep.subr.mxu0 %v74
  %118 = vmatpush1.msra.mxu0 %v73
  %119 = vmatprep.subr.mxu0 %v78
  %120 = vmatpush1.msra.mxu0 %v77
  %121 = vmatprep.subr.mxu0 %v82
  %122 = vmatpush1.msra.mxu0 %v81
  %123 = vmatprep.subr.mxu0 0.0
  %124 = vmatpush1.msra.mxu0 0.0
  %125 = vmatprep.subr.mxu0 0.0
  %126 = vmatpush1.msra.mxu0 0.0
  %127 = vmatprep.subr.mxu0 0.0
  %128 = vmatpush1.msra.mxu0 0.0
  %129 = vmatprep.subr.mxu0 0.0
  %130 = vmatpush1.msra.mxu0 0.0
  %131 = vmatprep.subr.mxu0 0.0
  %132 = vmatpush1.msra.mxu0 0.0
  %133 = vmatprep.subr.mxu0 0.0
  %134 = vmatpush1.msra.mxu0 0.0
  %135 = vmatprep.subr.mxu0 0.0
  %136 = vmatpush1.msra.mxu0 0.0
  %137 = vmatprep.subr.mxu0 0.0
  %138 = vmatpush1.msra.mxu0 0.0
  %139 = vmatprep.subr.mxu0 0.0
  %140 = vmatpush1.msra.mxu0 0.0
  %141 = vmatprep.subr.mxu0 0.0
  %142 = vmatpush1.msra.mxu0 0.0
  %143 = vmatprep.subr.mxu0 0.0
  %144 = vmatpush1.msra.mxu0 0.0
  %145 = vmatprep.subr.mxu0 0.0
  %146 = vmatpush1.msra.mxu0 0.0
  %147 = vmatprep.subr.mxu0 0.0
  %148 = vmatpush1.msra.mxu0 0.0
  %149 = vmatprep.subr.mxu0 0.0
  %150 = vmatpush1.msra.mxu0 0.0
  %151 = vmatprep.subr.mxu0 0.0
  %152 = vmatpush1.msra.mxu0 0.0
  %153 = vmatprep.subr.mxu0 0.0
  %154 = vmatpush1.msra.mxu0 0.0
  %155 = vmatprep.mubr.f32.mxu0 0.0
  %156 = vmatmul.mubr.f32.gmra.mrb[0].mxu0 %v20
  %v157 = vpop.f32.mrb[0].mxu0
  %v158 = vadd.f32 %v89, %v157
  %v159 = vpop.f32.mrb[0].mxu0
  %v160 = vadd.f32 %v89, %v159
  %161 = vdwg.mxu0
  %162 = vmatprep.subr.mxu0 %v24
  %163 = vmatpush1.msra.mxu0 %v23
  %164 = vmatprep.subr.mxu0 %v28
  %165 = vmatpush1.msra.mxu0 %v27
  %166 = vmatprep.subr.mxu0 %v32
  %167 = vmatpush1.msra.mxu0 %v31
  %168 = vmatprep.subr.mxu0 %v36
  %169 = vmatpush1.msra.mxu0 %v35
  %170 = vmatprep.subr.mxu0 %v40
  %171 = vmatpush1.msra.mxu0 %v39
  %172 = vmatprep.subr.mxu0 %v44
  %173 = vmatpush1.msra.mxu0 %v43
  %174 = vmatprep.subr.mxu0 %v48
  %175 = vmatpush1.msra.mxu0 %v47
  %176 = vmatprep.subr.mxu0 %v52
  %177 = vmatpush1.msra.mxu0 %v51
  %178 = vmatprep.subr.mxu0 %v56
  %179 = vmatpush1.msra.mxu0 %v55
  %180 = vmatprep.subr.mxu0 %v60
  %181 = vmatpush1.msra.mxu0 %v59
  %182 = vmatprep.subr.mxu0 %v64
  %183 = vmatpush1.msra.mxu0 %v63
  %184 = vmatprep.subr.mxu0 %v68
  %185 = vmatpush1.msra.mxu0 %v67
  %186 = vmatprep.subr.mxu0 %v72
  %187 = vmatpush1.msra.mxu0 %v71
  %188 = vmatprep.subr.mxu0 %v76
  %189 = vmatpush1.msra.mxu0 %v75
  %190 = vmatprep.subr.mxu0 %v80
  %191 = vmatpush1.msra.mxu0 %v79
  %192 = vmatprep.subr.mxu0 %v84
  %193 = vmatpush1.msra.mxu0 %v83
  %194 = vmatprep.subr.mxu0 0.0
  %195 = vmatpush1.msra.mxu0 0.0
  %196 = vmatprep.subr.mxu0 0.0
  %197 = vmatpush1.msra.mxu0 0.0
  %198 = vmatprep.subr.mxu0 0.0
  %199 = vmatpush1.msra.mxu0 0.0
  %200 = vmatprep.subr.mxu0 0.0
  %201 = vmatpush1.msra.mxu0 0.0
  %202 = vmatprep.subr.mxu0 0.0
  %203 = vmatpush1.msra.mxu0 0.0
  %204 = vmatprep.subr.mxu0 0.0
  %205 = vmatpush1.msra.mxu0 0.0
  %206 = vmatprep.subr.mxu0 0.0
  %207 = vmatpush1.msra.mxu0 0.0
  %208 = vmatprep.subr.mxu0 0.0
  %209 = vmatpush1.msra.mxu0 0.0
  %210 = vmatprep.subr.mxu0 0.0
  %211 = vmatpush1.msra.mxu0 0.0
  %212 = vmatprep.subr.mxu0 0.0
  %213 = vmatpush1.msra.mxu0 0.0
  %214 = vmatprep.subr.mxu0 0.0
  %215 = vmatpush1.msra.mxu0 0.0
  %216 = vmatprep.subr.mxu0 0.0
  %217 = vmatpush1.msra.mxu0 0.0
  %218 = vmatprep.subr.mxu0 0.0
  %219 = vmatpush1.msra.mxu0 0.0
  %220 = vmatprep.subr.mxu0 0.0
  %221 = vmatpush1.msra.mxu0 0.0
  %222 = vmatprep.subr.mxu0 0.0
  %223 = vmatpush1.msra.mxu0 0.0
  %224 = vmatprep.subr.mxu0 0.0
  %225 = vmatpush1.msra.mxu0 0.0
  %226 = vmatprep.mubr.f32.mxu0 0.0
  %227 = vmatmul.mubr.f32.gmra.mrb[0].mxu0 %v20
  %v228 = vpop.f32.mrb[0].mxu0
  %v229 = vadd.f32 %v89, %v228
  %v230 = vpop.f32.mrb[0].mxu0
  %v231 = vadd.f32 %v89, %v230
  %232 = vdwg.mxu0
  %v233 = vmul.f32 %v158, 0.5
  %v234 = vmul.f32 %v160, 0.5
  %v235 = vmul.f32 %v229, 0.5
  %v236 = vmul.f32 %v231, 0.5
  %v237 = vmul.f32 %v158, 0.70710677
  %v238 = vmul.f32 %v160, 0.70710677
  %v239 = vmul.f32 %v229, 0.70710677
  %v240 = vmul.f32 %v231, 0.70710677
  %v241 = vand.u32 2147483647, %v237
  %v242 = vand.u32 2147483647, %v238
  %v243 = vand.u32 2147483647, %v239
  %v244 = vand.u32 2147483647, %v240
  %v245 = vmul.f32 %v241, 0.3275911
  %v246 = vmul.f32 %v242, 0.3275911
  %v247 = vmul.f32 %v243, 0.3275911
  %v248 = vmul.f32 %v244, 0.3275911
  %v249 = vadd.f32 %v245, 1.0
  %v250 = vadd.f32 %v246, 1.0
  %v251 = vadd.f32 %v247, 1.0
  %v252 = vadd.f32 %v248, 1.0
  %v253 = vrcp.pop %v249
  %v254 = vrcp.pop %v250
  %v255 = vrcp.pop %v251
  %v256 = vrcp.pop %v252
  %v257 = vmul.f32 %v253, 1.0614054
  %v258 = vmul.f32 %v254, 1.0614054
  %v259 = vmul.f32 %v255, 1.0614054
  %v260 = vmul.f32 %v256, 1.0614054
  %v261 = vadd.f32 %v257, -1.4531521
  %v262 = vadd.f32 %v258, -1.4531521
  %v263 = vadd.f32 %v259, -1.4531521
  %v264 = vadd.f32 %v260, -1.4531521
  %v265 = vmul.f32 %v261, %v253
  %v266 = vmul.f32 %v262, %v254
  %v267 = vmul.f32 %v263, %v255
  %v268 = vmul.f32 %v264, %v256
  %v269 = vadd.f32 %v265, 1.4214138
  %v270 = vadd.f32 %v266, 1.4214138
  %v271 = vadd.f32 %v267, 1.4214138
  %v272 = vadd.f32 %v268, 1.4214138
  %v273 = vmul.f32 %v269, %v253
  %v274 = vmul.f32 %v270, %v254
  %v275 = vmul.f32 %v271, %v255
  %v276 = vmul.f32 %v272, %v256
  %v277 = vadd.f32 %v273, -0.28449672
  %v278 = vadd.f32 %v274, -0.28449672
  %v279 = vadd.f32 %v275, -0.28449672
  %v280 = vadd.f32 %v276, -0.28449672
  %v281 = vmul.f32 %v277, %v253
  %v282 = vmul.f32 %v278, %v254
  %v283 = vmul.f32 %v279, %v255
  %v284 = vmul.f32 %v280, %v256
  %v285 = vadd.f32 %v281, 0.2548296
  %v286 = vadd.f32 %v282, 0.2548296
  %v287 = vadd.f32 %v283, 0.2548296
  %v288 = vadd.f32 %v284, 0.2548296
  %v289 = vmul.f32 %v285, %v253
  %v290 = vmul.f32 %v286, %v254
  %v291 = vmul.f32 %v287, %v255
  %v292 = vmul.f32 %v288, %v256
  %v293 = vsub.f32 0.0, %v241
  %v294 = vsub.f32 0.0, %v242
  %v295 = vsub.f32 0.0, %v243
  %v296 = vsub.f32 0.0, %v244
  %v297 = vmul.f32 %v293, %v241
  %v298 = vmul.f32 %v294, %v242
  %v299 = vmul.f32 %v295, %v243
  %v300 = vmul.f32 %v296, %v244
  %v301 = vmul.f32 %v297, 1.442695
  %v302 = vpow.pop %v301
  %v303 = vmul.f32 %v298, 1.442695
  %v304 = vpow.pop %v303
  %v305 = vmul.f32 %v299, 1.442695
  %v306 = vpow.pop %v305
  %v307 = vmul.f32 %v300, 1.442695
  %v308 = vpow.pop %v307
  %v309 = vmul.f32 %v289, %v302
  %v310 = vmul.f32 %v290, %v304
  %v311 = vmul.f32 %v291, %v306
  %v312 = vmul.f32 %v292, %v308
  %v313 = vsub.f32 1.0, %v309
  %v314 = vsub.f32 1.0, %v310
  %v315 = vsub.f32 1.0, %v311
  %v316 = vsub.f32 1.0, %v312
  %vm317 = vcmp.ge.f32.partialorder %v237, 0.0
  %vm318 = vcmp.ge.f32.partialorder %v238, 0.0
  %vm319 = vcmp.ge.f32.partialorder %v239, 0.0
  %vm320 = vcmp.ge.f32.partialorder %v240, 0.0
  %v321 = vsub.f32 0.0, %v313
  %v322 = vsub.f32 0.0, %v314
  %v323 = vsub.f32 0.0, %v315
  %v324 = vsub.f32 0.0, %v316
  %v325 = vsel %vm317, %v313, %v321
  %v326 = vsel %vm318, %v314, %v322
  %v327 = vsel %vm319, %v315, %v323
  %v328 = vsel %vm320, %v316, %v324
  %v329 = vadd.f32 %v325, 1.0
  %v330 = vadd.f32 %v326, 1.0
  %v331 = vadd.f32 %v327, 1.0
  %v332 = vadd.f32 %v328, 1.0
  %v333 = vmul.f32 %v233, %v329
  %v334 = vmul.f32 %v234, %v330
  %v335 = vmul.f32 %v235, %v331
  %v336 = vmul.f32 %v236, %v332
  %v337 = vld [vmem:[%s3] sm:$0xf]
  %v338 = vld [vmem:[%s4] sm:$0xf]
  %vm339 = vcmask 1043456
  %v340 = vsel %vm339, %v333, 0.0
  %v341 = vsel %vm339, %v334, 0.0
  %v342 = vadd.f32 %v340, %v341
  %v343 = vsel %vm339, %v335, 0.0
  %v344 = vadd.f32 %v342, %v343
  %vm345 = vcmask 60416
  %v346 = vsel %vm345, %v336, 0.0
  %v347 = vadd.f32 %v344, %v346
  %348 = vadd.xlane.f32.xlu0 %v347
  %v349 = vpop.xlane.xlu0 %348
  %v350 = vrcp.pop 392.0
  %v351 = vmul.f32 %v349, %v350
  %v352 = vsub.f32 %v333, %v351
  %v353 = vsub.f32 %v334, %v351
  %v354 = vsub.f32 %v335, %v351
  %v355 = vsub.f32 %v336, %v351
  %v356 = vmul.f32 %v352, %v352
  %v357 = vmul.f32 %v353, %v353
  %v358 = vmul.f32 %v354, %v354
  %v359 = vmul.f32 %v355, %v355
  %v360 = vsel %vm339, %v356, 0.0
  %v361 = vsel %vm339, %v357, 0.0
  %v362 = vadd.f32 %v360, %v361
  %v363 = vsel %vm339, %v358, 0.0
  %v364 = vadd.f32 %v362, %v363
  %v365 = vsel %vm345, %v359, 0.0
  %v366 = vadd.f32 %v364, %v365
  %367 = vadd.xlane.f32.xlu0 %v366
  %v368 = vpop.xlane.xlu0 %367
  %v369 = vmul.f32 %v368, %v350
  %v370 = vadd.f32 %v369, 1e-05
  %v371 = vrsqrt.pop %v370
  %v372 = vmul.f32 %v352, %v371
  %v373 = vmul.f32 %v353, %v371
  %v374 = vmul.f32 %v354, %v371
  %v375 = vmul.f32 %v355, %v371
  %377 = vset.pattern.permute.xlu0 0
  %378 = vperm.xlu0 %377, %v337
  %v379 = vpop.permute.xlu0 %378
  %v381 = vmul.f32 %v372, %v379
  %v382 = vmul.f32 %v373, %v379
  %v383 = vmul.f32 %v374, %v379
  %v384 = vmul.f32 %v375, %v379
  %386 = vset.pattern.permute.xlu0 0
  %387 = vperm.xlu0 %386, %v338
  %v388 = vpop.permute.xlu0 %387
  %v390 = vadd.f32 %v381, %v388
  %v391 = vadd.f32 %v382, %v388
  %v392 = vadd.f32 %v383, %v388
  %v393 = vadd.f32 %v384, %v388
  %v398 = vcombine.low %v390, %v391
  %v399 = vcombine.low %v392, %v393
  %402 = vst [vmem:[%s5] sm:$0xff] %v398
  %vm403 = vcmask 64516
  %vm404 = vmor %vm403, %vm339
  %405 = vst.msk [vmem:[%s5 + $0x8] sm:$0xff] %vm404, %v399
  // Predicated region
  $region22: #{net3_forward.6} parent=0 // pred_check
    _
  $region23: #{net3_forward.6} parent=0 // pred_check_branch
    %407 = sbr.rel (0) target = $region25
  $region24: #{net3_forward.6} parent=0 // pred_region
    _
  $region25: #{net3_forward.6} parent=0 // pred_fallthru
    _
  // Predicated region
  $region26: #{net3_forward.6} parent=0 // pred_check
    _
  $region27: #{net3_forward.6} parent=0 // pred_check_branch
    %409 = sbr.rel (0) target = $region29
  $region28: #{net3_forward.6} parent=0 // pred_region
    _
  $region29: #{net3_forward.6} parent=0 // pred_fallthru
    _

// kernel: net3_forward.7
$region0: #{net3_forward.7}
  #allocation0 [shape = 'u32[]', space=smem, size = 0x4, offset = 0x4, fixed_abs, tag = 'smem constant byte address 0x4 - core index']
  #allocation1 [shape = 'u32[144,128]{1,0:T(1,128)}', space=vmem, size = 0x12000, scoped, tag = 'internal scratch']
  %s0 = inlined_call_operand.vmem [shape: f32[64,1568], index: 0, kind: input, shape index: {}]
  %s1 = inlined_call_operand.vmem [shape: f32[3,64], index: 1, kind: input, shape index: {}]
  %s2 = inlined_call_operand.vmem [shape: f32[3,1], index: 2, kind: input, shape index: {}]
  %s3 = inlined_call_operand.vmem [shape: f32[3,1568], index: 3, kind: output, shape index: {}]
  %s4 = sld [smem:[#allocation0]]
  $region22: #{net3_forward.7} parent=0
    _
  %s6 = ssub.s32 1, %s4
  %s7 = scalar_select 0, %s6, %s4
  // Predicated region
  $region2: #{net3_forward.7} parent=0 // pred_check
    _
  $region3: #{net3_forward.7} parent=0 // pred_check_branch
    %9 = sbr.rel (0) target = $region5
  $region4: #{net3_forward.7} parent=0 // pred_region
    _
  $region5: #{net3_forward.7} parent=0 // pred_fallthru
    _
  // Predicated region
  $region6: #{net3_forward.7} parent=0 // pred_check
    _
  $region7: #{net3_forward.7} parent=0 // pred_check_branch
    %11 = sbr.rel (0) target = $region9
  $region8: #{net3_forward.7} parent=0 // pred_region
    _
  $region9: #{net3_forward.7} parent=0 // pred_fallthru
    _
  // Predicated region
  $region10: #{net3_forward.7} parent=0 // pred_check
    _
  $region11: #{net3_forward.7} parent=0 // pred_check_branch
    %13 = sbr.rel (0) target = $region13
  $region12: #{net3_forward.7} parent=0 // pred_region
    _
  $region13: #{net3_forward.7} parent=0 // pred_fallthru
    _
  %v14 = vld [vmem:[%s1] sm:$0x7]
  %v15 = vld [vmem:[%s0] sm:$0xff]
  %v16 = vld [vmem:[%s0 + $0x8] sm:$0xff]
  %v17 = vld [vmem:[%s0 + $0x10] sm:$0xff]
  %v18 = vld [vmem:[%s0 + $0x18] sm:$0xff]
  %v19 = vld [vmem:[%s0 + $0x20] sm:$0xff]
  %v20 = vld [vmem:[%s0 + $0x28] sm:$0xff]
  %v21 = vld [vmem:[%s0 + $0x30] sm:$0xff]
  %v22 = vld [vmem:[%s0 + $0x38] sm:$0xff]
  %v23 = vld [vmem:[%s0 + $0x40] sm:$0xff]
  %v24 = vld [vmem:[%s0 + $0x48] sm:$0xff]
  %v25 = vld [vmem:[%s0 + $0x50] sm:$0xff]
  %v26 = vld [vmem:[%s0 + $0x58] sm:$0xff]
  %v27 = vld [vmem:[%s0 + $0x60] sm:$0xff]
  %v28 = vld [vmem:[%s0 + $0x68] sm:$0xff]
  %v29 = vld [vmem:[%s0 + $0x70] sm:$0xff]
  %v30 = vld [vmem:[%s0 + $0x78] sm:$0xff]
  %v31 = vld [vmem:[%s0 + $0x80] sm:$0xff]
  %v32 = vld [vmem:[%s0 + $0x88] sm:$0xff]
  %v33 = vld [vmem:[%s0 + $0x90] sm:$0xff]
  %v34 = vld [vmem:[%s0 + $0x98] sm:$0xff]
  %v35 = vld [vmem:[%s0 + $0xa0] sm:$0xff]
  %v36 = vld [vmem:[%s0 + $0xa8] sm:$0xff]
  %v37 = vld [vmem:[%s0 + $0xb0] sm:$0xff]
  %v38 = vld [vmem:[%s0 + $0xb8] sm:$0xff]
  %v39 = vld [vmem:[%s0 + $0xc0] sm:$0xff]
  %v40 = vld [vmem:[%s0 + $0xc8] sm:$0xff]
  %v41 = vld [vmem:[%s0 + $0xd0] sm:$0xff]
  %v42 = vld [vmem:[%s0 + $0xd8] sm:$0xff]
  %v43 = vld [vmem:[%s0 + $0xe0] sm:$0xff]
  %v44 = vld [vmem:[%s0 + $0xe8] sm:$0xff]
  %v45 = vld [vmem:[%s0 + $0xf0] sm:$0xff]
  %v46 = vld [vmem:[%s0 + $0xf8] sm:$0xff]
  %v47 = vld [vmem:[%s0 + $0x100] sm:$0xff]
  %v48 = vld [vmem:[%s0 + $0x108] sm:$0xff]
  %v49 = vld [vmem:[%s0 + $0x110] sm:$0xff]
  %v50 = vld [vmem:[%s0 + $0x118] sm:$0xff]
  %v51 = vld [vmem:[%s0 + $0x120] sm:$0xff]
  %v52 = vld [vmem:[%s0 + $0x128] sm:$0xff]
  %v53 = vld [vmem:[%s0 + $0x130] sm:$0xff]
  %v54 = vld [vmem:[%s0 + $0x138] sm:$0xff]
  %v55 = vld [vmem:[%s0 + $0x140] sm:$0xff]
  %v56 = vld [vmem:[%s0 + $0x148] sm:$0xff]
  %v57 = vld [vmem:[%s0 + $0x150] sm:$0xff]
  %v58 = vld [vmem:[%s0 + $0x158] sm:$0xff]
  %v59 = vld [vmem:[%s0 + $0x160] sm:$0xff]
  %v60 = vld [vmem:[%s0 + $0x168] sm:$0xff]
  %v61 = vld [vmem:[%s0 + $0x170] sm:$0xff]
  %v62 = vld [vmem:[%s0 + $0x178] sm:$0xff]
  %v63 = vld [vmem:[%s0 + $0x180] sm:$0xff]
  %v64 = vld [vmem:[%s0 + $0x188] sm:$0xff]
  %v65 = vld [vmem:[%s0 + $0x190] sm:$0xff]
  %v66 = vld [vmem:[%s0 + $0x198] sm:$0xff]
  %v67 = vld [vmem:[%s0 + $0x1a0] sm:$0xff]
  %v68 = vld [vmem:[%s0 + $0x1a8] sm:$0xff]
  %v69 = vld [vmem:[%s0 + $0x1b0] sm:$0xff]
  %v70 = vld [vmem:[%s0 + $0x1b8] sm:$0xff]
  %v71 = vld [vmem:[%s0 + $0x1c0] sm:$0xff]
  %v72 = vld [vmem:[%s0 + $0x1c8] sm:$0xff]
  %v73 = vld [vmem:[%s0 + $0x1d0] sm:$0xff]
  %v74 = vld [vmem:[%s0 + $0x1d8] sm:$0xff]
  %v75 = vld [vmem:[%s0 + $0x1e0] sm:$0xff]
  %v76 = vld [vmem:[%s0 + $0x1e8] sm:$0xff]
  %v77 = vld [vmem:[%s0 + $0x1f0] sm:$0xff]
  %v78 = vld [vmem:[%s0 + $0x1f8] sm:$0xff]
  %v79 = vld [vmem:[%s0 + $0x200] sm:$0xff]
  %v80 = vld [vmem:[%s0 + $0x208] sm:$0xff]
  %v81 = vld [vmem:[%s0 + $0x210] sm:$0xff]
  %v82 = vld [vmem:[%s0 + $0x218] sm:$0xff]
  %v83 = vld [vmem:[%s0 + $0x220] sm:$0xff]
  %v84 = vld [vmem:[%s0 + $0x228] sm:$0xff]
  %v85 = vld [vmem:[%s0 + $0x230] sm:$0xff]
  %v86 = vld [vmem:[%s0 + $0x238] sm:$0xff]
  %v87 = vld [vmem:[%s0 + $0x240] sm:$0xff]
  %v88 = vld [vmem:[%s0 + $0x248] sm:$0xff]
  %v89 = vld [vmem:[%s0 + $0x250] sm:$0xff]
  %v90 = vld [vmem:[%s0 + $0x258] sm:$0xff]
  %v91 = vld [vmem:[%s0 + $0x260] sm:$0xff]
  %v92 = vld [vmem:[%s0 + $0x268] sm:$0xff]
  %v93 = vld [vmem:[%s0 + $0x270] sm:$0xff]
  %v94 = vld [vmem:[%s0 + $0x278] sm:$0xff]
  %v95 = vld [vmem:[%s0 + $0x280] sm:$0xff]
  %v96 = vld [vmem:[%s0 + $0x288] sm:$0xff]
  %v97 = vld [vmem:[%s0 + $0x290] sm:$0xff]
  %v98 = vld [vmem:[%s0 + $0x298] sm:$0xff]
  %v99 = vld [vmem:[%s0 + $0x2a0] sm:$0xff]
  %v100 = vld [vmem:[%s0 + $0x2a8] sm:$0xff]
  %v101 = vld [vmem:[%s0 + $0x2b0] sm:$0xff]
  %v102 = vld [vmem:[%s0 + $0x2b8] sm:$0xff]
  %v103 = vld [vmem:[%s0 + $0x2c0] sm:$0xff]
  %v104 = vld [vmem:[%s0 + $0x2c8] sm:$0xff]
  %v105 = vld [vmem:[%s0 + $0x2d0] sm:$0xff]
  %v106 = vld [vmem:[%s0 + $0x2d8] sm:$0xff]
  %v107 = vld [vmem:[%s0 + $0x2e0] sm:$0xff]
  %v108 = vld [vmem:[%s0 + $0x2e8] sm:$0xff]
  %v109 = vld [vmem:[%s0 + $0x2f0] sm:$0xff]
  %v110 = vld [vmem:[%s0 + $0x2f8] sm:$0xff]
  %v111 = vld [vmem:[%s0 + $0x300] sm:$0xff]
  %v112 = vld [vmem:[%s0 + $0x308] sm:$0xff]
  %v113 = vld [vmem:[%s0 + $0x310] sm:$0xff]
  %v114 = vld [vmem:[%s0 + $0x318] sm:$0xff]
  %v115 = vld [vmem:[%s0 + $0x320] sm:$0xff]
  %v116 = vld [vmem:[%s0 + $0x328] sm:$0xff]
  %v117 = vld [vmem:[%s0 + $0x330] sm:$0xff]
  %v118 = vld [vmem:[%s0 + $0x338] sm:$0xff]
  %v119 = vld [vmem:[%s2] sm:$0x7]
  %121 = vset.pattern.permute.xlu0 0
  %122 = vperm.xlu0 %121, %v119
  %v123 = vpop.permute.xlu0 %122
  %vm125 = vcmask 523264
  %v127 = vsel %vm125, %v14, 0
  %129 = vmatprep.subr.mxu0 %v16
  %130 = vmatpush1.msra.mxu0 %v15
  %131 = vmatprep.subr.mxu0 %v29
  %132 = vmatpush1.msra.mxu0 %v28
  %133 = vmatprep.subr.mxu0 %v42
  %134 = vmatpush1.msra.mxu0 %v41
  %135 = vmatprep.subr.mxu0 %v55
  %136 = vmatpush1.msra.mxu0 %v54
  %137 = vmatprep.subr.mxu0 %v68
  %138 = vmatpush1.msra.mxu0 %v67
  %139 = vmatprep.subr.mxu0 %v81
  %140 = vmatpush1.msra.mxu0 %v80
  %141 = vmatprep.subr.mxu0 %v94
  %142 = vmatpush1.msra.mxu0 %v93
  %143 = vmatprep.subr.mxu0 %v107
  %144 = vmatpush1.msra.mxu0 %v106
  %145 = vmatprep.subr.mxu0 0.0
  %146 = vmatpush1.msra.mxu0 0.0
  %147 = vmatprep.subr.mxu0 0.0
  %148 = vmatpush1.msra.mxu0 0.0
  %149 = vmatprep.subr.mxu0 0.0
  %150 = vmatpush1.msra.mxu0 0.0
  %151 = vmatprep.subr.mxu0 0.0
  %152 = vmatpush1.msra.mxu0 0.0
  %153 = vmatprep.subr.mxu0 0.0
  %154 = vmatpush1.msra.mxu0 0.0
  %155 = vmatprep.subr.mxu0 0.0
  %156 = vmatpush1.msra.mxu0 0.0
  %157 = vmatprep.subr.mxu0 0.0
  %158 = vmatpush1.msra.mxu0 0.0
  %159 = vmatprep.subr.mxu0 0.0
  %160 = vmatpush1.msra.mxu0 0.0
  %161 = vmatprep.subr.mxu0 0.0
  %162 = vmatpush1.msra.mxu0 0.0
  %163 = vmatprep.subr.mxu0 0.0
  %164 = vmatpush1.msra.mxu0 0.0
  %165 = vmatprep.subr.mxu0 0.0
  %166 = vmatpush1.msra.mxu0 0.0
  %167 = vmatprep.subr.mxu0 0.0
  %168 = vmatpush1.msra.mxu0 0.0
  %169 = vmatprep.subr.mxu0 0.0
  %170 = vmatpush1.msra.mxu0 0.0
  %171 = vmatprep.subr.mxu0 0.0
  %172 = vmatpush1.msra.mxu0 0.0
  %173 = vmatprep.subr.mxu0 0.0
  %174 = vmatpush1.msra.mxu0 0.0
  %175 = vmatprep.subr.mxu0 0.0
  %176 = vmatpush1.msra.mxu0 0.0
  %177 = vmatprep.subr.mxu0 0.0
  %178 = vmatpush1.msra.mxu0 0.0
  %179 = vmatprep.subr.mxu0 0.0
  %180 = vmatpush1.msra.mxu0 0.0
  %181 = vmatprep.subr.mxu0 0.0
  %182 = vmatpush1.msra.mxu0 0.0
  %183 = vmatprep.subr.mxu0 0.0
  %184 = vmatpush1.msra.mxu0 0.0
  %185 = vmatprep.subr.mxu0 0.0
  %186 = vmatpush1.msra.mxu0 0.0
  %187 = vmatprep.subr.mxu0 0.0
  %188 = vmatpush1.msra.mxu0 0.0
  %189 = vmatprep.subr.mxu0 0.0
  %190 = vmatpush1.msra.mxu0 0.0
  %191 = vmatprep.subr.mxu0 0.0
  %192 = vmatpush1.msra.mxu0 0.0
  %193 = vmatprep.mubr.f32.mxu0 0.0
  %194 = vmatmul.mubr.f32.gmra.mrb[0].mxu0 %v127
  %v195 = vpop.f32.mrb[0].mxu0
  %v196 = vadd.f32 %v123, %v195
  %v197 = vpop.f32.mrb[0].mxu0
  %v198 = vadd.f32 %v123, %v197
  %199 = vdwg.mxu0
  %200 = vmatprep.subr.mxu0 %v18
  %201 = vmatpush1.msra.mxu0 %v17
  %202 = vmatprep.subr.mxu0 %v31
  %203 = vmatpush1.msra.mxu0 %v30
  %204 = vmatprep.subr.mxu0 %v44
  %205 = vmatpush1.msra.mxu0 %v43
  %206 = vmatprep.subr.mxu0 %v57
  %207 = vmatpush1.msra.mxu0 %v56
  %208 = vmatprep.subr.mxu0 %v70
  %209 = vmatpush1.msra.mxu0 %v69
  %210 = vmatprep.subr.mxu0 %v83
  %211 = vmatpush1.msra.mxu0 %v82
  %212 = vmatprep.subr.mxu0 %v96
  %213 = vmatpush1.msra.mxu0 %v95
  %214 = vmatprep.subr.mxu0 %v109
  %215 = vmatpush1.msra.mxu0 %v108
  %216 = vmatprep.subr.mxu0 0.0
  %217 = vmatpush1.msra.mxu0 0.0
  %218 = vmatprep.subr.mxu0 0.0
  %219 = vmatpush1.msra.mxu0 0.0
  %220 = vmatprep.subr.mxu0 0.0
  %221 = vmatpush1.msra.mxu0 0.0
  %222 = vmatprep.subr.mxu0 0.0
  %223 = vmatpush1.msra.mxu0 0.0
  %224 = vmatprep.subr.mxu0 0.0
  %225 = vmatpush1.msra.mxu0 0.0
  %226 = vmatprep.subr.mxu0 0.0
  %227 = vmatpush1.msra.mxu0 0.0
  %228 = vmatprep.subr.mxu0 0.0
  %229 = vmatpush1.msra.mxu0 0.0
  %230 = vmatprep.subr.mxu0 0.0
  %231 = vmatpush1.msra.mxu0 0.0
  %232 = vmatprep.subr.mxu0 0.0
  %233 = vmatpush1.msra.mxu0 0.0
  %234 = vmatprep.subr.mxu0 0.0
  %235 = vmatpush1.msra.mxu0 0.0
  %236 = vmatprep.subr.mxu0 0.0
  %237 = vmatpush1.msra.mxu0 0.0
  %238 = vmatprep.subr.mxu0 0.0
  %239 = vmatpush1.msra.mxu0 0.0
  %240 = vmatprep.subr.mxu0 0.0
  %241 = vmatpush1.msra.mxu0 0.0
  %242 = vmatprep.subr.mxu0 0.0
  %243 = vmatpush1.msra.mxu0 0.0
  %244 = vmatprep.subr.mxu0 0.0
  %245 = vmatpush1.msra.mxu0 0.0
  %246 = vmatprep.subr.mxu0 0.0
  %247 = vmatpush1.msra.mxu0 0.0
  %248 = vmatprep.subr.mxu0 0.0
  %249 = vmatpush1.msra.mxu0 0.0
  %250 = vmatprep.subr.mxu0 0.0
  %251 = vmatpush1.msra.mxu0 0.0
  %252 = vmatprep.subr.mxu0 0.0
  %253 = vmatpush1.msra.mxu0 0.0
  %254 = vmatprep.subr.mxu0 0.0
  %255 = vmatpush1.msra.mxu0 0.0
  %256 = vmatprep.subr.mxu0 0.0
  %257 = vmatpush1.msra.mxu0 0.0
  %258 = vmatprep.subr.mxu0 0.0
  %259 = vmatpush1.msra.mxu0 0.0
  %260 = vmatprep.subr.mxu0 0.0
  %261 = vmatpush1.msra.mxu0 0.0
  %262 = vmatprep.subr.mxu0 0.0
  %263 = vmatpush1.msra.mxu0 0.0
  %264 = vmatprep.mubr.f32.mxu0 0.0
  %265 = vmatmul.mubr.f32.gmra.mrb[0].mxu0 %v127
  %v266 = vpop.f32.mrb[0].mxu0
  %v267 = vadd.f32 %v123, %v266
  %v268 = vpop.f32.mrb[0].mxu0
  %v269 = vadd.f32 %v123, %v268
  %270 = vdwg.mxu0
  %271 = vmatprep.subr.mxu0 %v20
  %272 = vmatpush1.msra.mxu0 %v19
  %273 = vmatprep.subr.mxu0 %v33
  %274 = vmatpush1.msra.mxu0 %v32
  %275 = vmatprep.subr.mxu0 %v46
  %276 = vmatpush1.msra.mxu0 %v45
  %277 = vmatprep.subr.mxu0 %v59
  %278 = vmatpush1.msra.mxu0 %v58
  %279 = vmatprep.subr.mxu0 %v72
  %280 = vmatpush1.msra.mxu0 %v71
  %281 = vmatprep.subr.mxu0 %v85
  %282 = vmatpush1.msra.mxu0 %v84
  %283 = vmatprep.subr.mxu0 %v98
  %284 = vmatpush1.msra.mxu0 %v97
  %285 = vmatprep.subr.mxu0 %v111
  %286 = vmatpush1.msra.mxu0 %v110
  %287 = vmatprep.subr.mxu0 0.0
  %288 = vmatpush1.msra.mxu0 0.0
  %289 = vmatprep.subr.mxu0 0.0
  %290 = vmatpush1.msra.mxu0 0.0
  %291 = vmatprep.subr.mxu0 0.0
  %292 = vmatpush1.msra.mxu0 0.0
  %293 = vmatprep.subr.mxu0 0.0
  %294 = vmatpush1.msra.mxu0 0.0
  %295 = vmatprep.subr.mxu0 0.0
  %296 = vmatpush1.msra.mxu0 0.0
  %297 = vmatprep.subr.mxu0 0.0
  %298 = vmatpush1.msra.mxu0 0.0
  %299 = vmatprep.subr.mxu0 0.0
  %300 = vmatpush1.msra.mxu0 0.0
  %301 = vmatprep.subr.mxu0 0.0
  %302 = vmatpush1.msra.mxu0 0.0
  %303 = vmatprep.subr.mxu0 0.0
  %304 = vmatpush1.msra.mxu0 0.0
  %305 = vmatprep.subr.mxu0 0.0
  %306 = vmatpush1.msra.mxu0 0.0
  %307 = vmatprep.subr.mxu0 0.0
  %308 = vmatpush1.msra.mxu0 0.0
  %309 = vmatprep.subr.mxu0 0.0
  %310 = vmatpush1.msra.mxu0 0.0
  %311 = vmatprep.subr.mxu0 0.0
  %312 = vmatpush1.msra.mxu0 0.0
  %313 = vmatprep.subr.mxu0 0.0
  %314 = vmatpush1.msra.mxu0 0.0
  %315 = vmatprep.subr.mxu0 0.0
  %316 = vmatpush1.msra.mxu0 0.0
  %317 = vmatprep.subr.mxu0 0.0
  %318 = vmatpush1.msra.mxu0 0.0
  %319 = vmatprep.subr.mxu0 0.0
  %320 = vmatpush1.msra.mxu0 0.0
  %321 = vmatprep.subr.mxu0 0.0
  %322 = vmatpush1.msra.mxu0 0.0
  %323 = vmatprep.subr.mxu0 0.0
  %324 = vmatpush1.msra.mxu0 0.0
  %325 = vmatprep.subr.mxu0 0.0
  %326 = vmatpush1.msra.mxu0 0.0
  %327 = vmatprep.subr.mxu0 0.0
  %328 = vmatpush1.msra.mxu0 0.0
  %329 = vmatprep.subr.mxu0 0.0
  %330 = vmatpush1.msra.mxu0 0.0
  %331 = vmatprep.subr.mxu0 0.0
  %332 = vmatpush1.msra.mxu0 0.0
  %333 = vmatprep.subr.mxu0 0.0
  %334 = vmatpush1.msra.mxu0 0.0
  %335 = vmatprep.mubr.f32.mxu0 0.0
  %336 = vmatmul.mubr.f32.gmra.mrb[0].mxu0 %v127
  %v337 = vpop.f32.mrb[0].mxu0
  %v338 = vadd.f32 %v123, %v337
  %v339 = vpop.f32.mrb[0].mxu0
  %v340 = vadd.f32 %v123, %v339
  %341 = vdwg.mxu0
  %342 = vmatprep.subr.mxu0 %v22
  %343 = vmatpush1.msra.mxu0 %v21
  %344 = vmatprep.subr.mxu0 %v35
  %345 = vmatpush1.msra.mxu0 %v34
  %346 = vmatprep.subr.mxu0 %v48
  %347 = vmatpush1.msra.mxu0 %v47
  %348 = vmatprep.subr.mxu0 %v61
  %349 = vmatpush1.msra.mxu0 %v60
  %350 = vmatprep.subr.mxu0 %v74
  %351 = vmatpush1.msra.mxu0 %v73
  %352 = vmatprep.subr.mxu0 %v87
  %353 = vmatpush1.msra.mxu0 %v86
  %354 = vmatprep.subr.mxu0 %v100
  %355 = vmatpush1.msra.mxu0 %v99
  %356 = vmatprep.subr.mxu0 %v113
  %357 = vmatpush1.msra.mxu0 %v112
  %358 = vmatprep.subr.mxu0 0.0
  %359 = vmatpush1.msra.mxu0 0.0
  %360 = vmatprep.subr.mxu0 0.0
  %361 = vmatpush1.msra.mxu0 0.0
  %362 = vmatprep.subr.mxu0 0.0
  %363 = vmatpush1.msra.mxu0 0.0
  %364 = vmatprep.subr.mxu0 0.0
  %365 = vmatpush1.msra.mxu0 0.0
  %366 = vmatprep.subr.mxu0 0.0
  %367 = vmatpush1.msra.mxu0 0.0
  %368 = vmatprep.subr.mxu0 0.0
  %369 = vmatpush1.msra.mxu0 0.0
  %370 = vmatprep.subr.mxu0 0.0
  %371 = vmatpush1.msra.mxu0 0.0
  %372 = vmatprep.subr.mxu0 0.0
  %373 = vmatpush1.msra.mxu0 0.0
  %374 = vmatprep.subr.mxu0 0.0
  %375 = vmatpush1.msra.mxu0 0.0
  %376 = vmatprep.subr.mxu0 0.0
  %377 = vmatpush1.msra.mxu0 0.0
  %378 = vmatprep.subr.mxu0 0.0
  %379 = vmatpush1.msra.mxu0 0.0
  %380 = vmatprep.subr.mxu0 0.0
  %381 = vmatpush1.msra.mxu0 0.0
  %382 = vmatprep.subr.mxu0 0.0
  %383 = vmatpush1.msra.mxu0 0.0
  %384 = vmatprep.subr.mxu0 0.0
  %385 = vmatpush1.msra.mxu0 0.0
  %386 = vmatprep.subr.mxu0 0.0
  %387 = vmatpush1.msra.mxu0 0.0
  %388 = vmatprep.subr.mxu0 0.0
  %389 = vmatpush1.msra.mxu0 0.0
  %390 = vmatprep.subr.mxu0 0.0
  %391 = vmatpush1.msra.mxu0 0.0
  %392 = vmatprep.subr.mxu0 0.0
  %393 = vmatpush1.msra.mxu0 0.0
  %394 = vmatprep.subr.mxu0 0.0
  %395 = vmatpush1.msra.mxu0 0.0
  %396 = vmatprep.subr.mxu0 0.0
  %397 = vmatpush1.msra.mxu0 0.0
  %398 = vmatprep.subr.mxu0 0.0
  %399 = vmatpush1.msra.mxu0 0.0
  %400 = vmatprep.subr.mxu0 0.0
  %401 = vmatpush1.msra.mxu0 0.0
  %402 = vmatprep.subr.mxu0 0.0
  %403 = vmatpush1.msra.mxu0 0.0
  %404 = vmatprep.subr.mxu0 0.0
  %405 = vmatpush1.msra.mxu0 0.0
  %406 = vmatprep.mubr.f32.mxu0 0.0
  %407 = vmatmul.mubr.f32.gmra.mrb[0].mxu0 %v127
  %v408 = vpop.f32.mrb[0].mxu0
  %v409 = vadd.f32 %v123, %v408
  %v410 = vpop.f32.mrb[0].mxu0
  %v411 = vadd.f32 %v123, %v410
  %412 = vdwg.mxu0
  %413 = vmatprep.subr.mxu0 %v24
  %414 = vmatpush1.msra.mxu0 %v23
  %415 = vmatprep.subr.mxu0 %v37
  %416 = vmatpush1.msra.mxu0 %v36
  %417 = vmatprep.subr.mxu0 %v50
  %418 = vmatpush1.msra.mxu0 %v49
  %419 = vmatprep.subr.mxu0 %v63
  %420 = vmatpush1.msra.mxu0 %v62
  %421 = vmatprep.subr.mxu0 %v76
  %422 = vmatpush1.msra.mxu0 %v75
  %423 = vmatprep.subr.mxu0 %v89
  %424 = vmatpush1.msra.mxu0 %v88
  %425 = vmatprep.subr.mxu0 %v102
  %426 = vmatpush1.msra.mxu0 %v101
  %427 = vmatprep.subr.mxu0 %v115
  %428 = vmatpush1.msra.mxu0 %v114
  %429 = vmatprep.subr.mxu0 0.0
  %430 = vmatpush1.msra.mxu0 0.0
  %431 = vmatprep.subr.mxu0 0.0
  %432 = vmatpush1.msra.mxu0 0.0
  %433 = vmatprep.subr.mxu0 0.0
  %434 = vmatpush1.msra.mxu0 0.0
  %435 = vmatprep.subr.mxu0 0.0
  %436 = vmatpush1.msra.mxu0 0.0
  %437 = vmatprep.subr.mxu0 0.0
  %438 = vmatpush1.msra.mxu0 0.0
  %439 = vmatprep.subr.mxu0 0.0
  %440 = vmatpush1.msra.mxu0 0.0
  %441 = vmatprep.subr.mxu0 0.0
  %442 = vmatpush1.msra.mxu0 0.0
  %443 = vmatprep.subr.mxu0 0.0
  %444 = vmatpush1.msra.mxu0 0.0
  %445 = vmatprep.subr.mxu0 0.0
  %446 = vmatpush1.msra.mxu0 0.0
  %447 = vmatprep.subr.mxu0 0.0
  %448 = vmatpush1.msra.mxu0 0.0
  %449 = vmatprep.subr.mxu0 0.0
  %450 = vmatpush1.msra.mxu0 0.0
  %451 = vmatprep.subr.mxu0 0.0
  %452 = vmatpush1.msra.mxu0 0.0
  %453 = vmatprep.subr.mxu0 0.0
  %454 = vmatpush1.msra.mxu0 0.0
  %455 = vmatprep.subr.mxu0 0.0
  %456 = vmatpush1.msra.mxu0 0.0
  %457 = vmatprep.subr.mxu0 0.0
  %458 = vmatpush1.msra.mxu0 0.0
  %459 = vmatprep.subr.mxu0 0.0
  %460 = vmatpush1.msra.mxu0 0.0
  %461 = vmatprep.subr.mxu0 0.0
  %462 = vmatpush1.msra.mxu0 0.0
  %463 = vmatprep.subr.mxu0 0.0
  %464 = vmatpush1.msra.mxu0 0.0
  %465 = vmatprep.subr.mxu0 0.0
  %466 = vmatpush1.msra.mxu0 0.0
  %467 = vmatprep.subr.mxu0 0.0
  %468 = vmatpush1.msra.mxu0 0.0
  %469 = vmatprep.subr.mxu0 0.0
  %470 = vmatpush1.msra.mxu0 0.0
  %471 = vmatprep.subr.mxu0 0.0
  %472 = vmatpush1.msra.mxu0 0.0
  %473 = vmatprep.subr.mxu0 0.0
  %474 = vmatpush1.msra.mxu0 0.0
  %475 = vmatprep.subr.mxu0 0.0
  %476 = vmatpush1.msra.mxu0 0.0
  %477 = vmatprep.mubr.f32.mxu0 0.0
  %478 = vmatmul.mubr.f32.gmra.mrb[0].mxu0 %v127
  %v479 = vpop.f32.mrb[0].mxu0
  %v480 = vadd.f32 %v123, %v479
  %v481 = vpop.f32.mrb[0].mxu0
  %v482 = vadd.f32 %v123, %v481
  %483 = vdwg.mxu0
  %484 = vmatprep.subr.mxu0 %v26
  %485 = vmatpush1.msra.mxu0 %v25
  %486 = vmatprep.subr.mxu0 %v39
  %487 = vmatpush1.msra.mxu0 %v38
  %488 = vmatprep.subr.mxu0 %v52
  %489 = vmatpush1.msra.mxu0 %v51
  %490 = vmatprep.subr.mxu0 %v65
  %491 = vmatpush1.msra.mxu0 %v64
  %492 = vmatprep.subr.mxu0 %v78
  %493 = vmatpush1.msra.mxu0 %v77
  %494 = vmatprep.subr.mxu0 %v91
  %495 = vmatpush1.msra.mxu0 %v90
  %496 = vmatprep.subr.mxu0 %v104
  %497 = vmatpush1.msra.mxu0 %v103
  %498 = vmatprep.subr.mxu0 %v117
  %499 = vmatpush1.msra.mxu0 %v116
  %500 = vmatprep.subr.mxu0 0.0
  %501 = vmatpush1.msra.mxu0 0.0
  %502 = vmatprep.subr.mxu0 0.0
  %503 = vmatpush1.msra.mxu0 0.0
  %504 = vmatprep.subr.mxu0 0.0
  %505 = vmatpush1.msra.mxu0 0.0
  %506 = vmatprep.subr.mxu0 0.0
  %507 = vmatpush1.msra.mxu0 0.0
  %508 = vmatprep.subr.mxu0 0.0
  %509 = vmatpush1.msra.mxu0 0.0
  %510 = vmatprep.subr.mxu0 0.0
  %511 = vmatpush1.msra.mxu0 0.0
  %512 = vmatprep.subr.mxu0 0.0
  %513 = vmatpush1.msra.mxu0 0.0
  %514 = vmatprep.subr.mxu0 0.0
  %515 = vmatpush1.msra.mxu0 0.0
  %516 = vmatprep.subr.mxu0 0.0
  %517 = vmatpush1.msra.mxu0 0.0
  %518 = vmatprep.subr.mxu0 0.0
  %519 = vmatpush1.msra.mxu0 0.0
  %520 = vmatprep.subr.mxu0 0.0
  %521 = vmatpush1.msra.mxu0 0.0
  %522 = vmatprep.subr.mxu0 0.0
  %523 = vmatpush1.msra.mxu0 0.0
  %524 = vmatprep.subr.mxu0 0.0
  %525 = vmatpush1.msra.mxu0 0.0
  %526 = vmatprep.subr.mxu0 0.0
  %527 = vmatpush1.msra.mxu0 0.0
  %528 = vmatprep.subr.mxu0 0.0
  %529 = vmatpush1.msra.mxu0 0.0
  %530 = vmatprep.subr.mxu0 0.0
  %531 = vmatpush1.msra.mxu0 0.0
  %532 = vmatprep.subr.mxu0 0.0
  %533 = vmatpush1.msra.mxu0 0.0
  %534 = vmatprep.subr.mxu0 0.0
  %535 = vmatpush1.msra.mxu0 0.0
  %536 = vmatprep.subr.mxu0 0.0
  %537 = vmatpush1.msra.mxu0 0.0
  %538 = vmatprep.subr.mxu0 0.0
  %539 = vmatpush1.msra.mxu0 0.0
  %540 = vmatprep.subr.mxu0 0.0
  %541 = vmatpush1.msra.mxu0 0.0
  %542 = vmatprep.subr.mxu0 0.0
  %543 = vmatpush1.msra.mxu0 0.0
  %544 = vmatprep.subr.mxu0 0.0
  %545 = vmatpush1.msra.mxu0 0.0
  %546 = vmatprep.subr.mxu0 0.0
  %547 = vmatpush1.msra.mxu0 0.0
  %548 = vmatprep.mubr.f32.mxu0 0.0
  %549 = vmatmul.mubr.f32.gmra.mrb[0].mxu0 %v127
  %v550 = vpop.f32.mrb[0].mxu0
  %v551 = vadd.f32 %v123, %v550
  %v552 = vpop.f32.mrb[0].mxu0
  %v553 = vadd.f32 %v123, %v552
  %554 = vdwg.mxu0
  %555 = vmatprep.subr.mxu0 0.0
  %556 = vmatpush1.msra.mxu0 %v27
  %557 = vmatprep.subr.mxu0 0.0
  %558 = vmatpush1.msra.mxu0 %v40
  %559 = vmatprep.subr.mxu0 0.0
  %560 = vmatpush1.msra.mxu0 %v53
  %561 = vmatprep.subr.mxu0 0.0
  %562 = vmatpush1.msra.mxu0 %v66
  %563 = vmatprep.subr.mxu0 0.0
  %564 = vmatpush1.msra.mxu0 %v79
  %565 = vmatprep.subr.mxu0 0.0
  %566 = vmatpush1.msra.mxu0 %v92
  %567 = vmatprep.subr.mxu0 0.0
  %568 = vmatpush1.msra.mxu0 %v105
  %569 = vmatprep.subr.mxu0 0.0
  %570 = vmatpush1.msra.mxu0 %v118
  %571 = vmatprep.subr.mxu0 0.0
  %572 = vmatpush1.msra.mxu0 0.0
  %573 = vmatprep.subr.mxu0 0.0
  %574 = vmatpush1.msra.mxu0 0.0
  %575 = vmatprep.subr.mxu0 0.0
  %576 = vmatpush1.msra.mxu0 0.0
  %577 = vmatprep.subr.mxu0 0.0
  %578 = vmatpush1.msra.mxu0 0.0
  %579 = vmatprep.subr.mxu0 0.0
  %580 = vmatpush1.msra.mxu0 0.0
  %581 = vmatprep.subr.mxu0 0.0
  %582 = vmatpush1.msra.mxu0 0.0
  %583 = vmatprep.subr.mxu0 0.0
  %584 = vmatpush1.msra.mxu0 0.0
  %585 = vmatprep.subr.mxu0 0.0
  %586 = vmatpush1.msra.mxu0 0.0
  %587 = vmatprep.subr.mxu0 0.0
  %588 = vmatpush1.msra.mxu0 0.0
  %589 = vmatprep.subr.mxu0 0.0
  %590 = vmatpush1.msra.mxu0 0.0
  %591 = vmatprep.subr.mxu0 0.0
  %592 = vmatpush1.msra.mxu0 0.0
  %593 = vmatprep.subr.mxu0 0.0
  %594 = vmatpush1.msra.mxu0 0.0
  %595 = vmatprep.subr.mxu0 0.0
  %596 = vmatpush1.msra.mxu0 0.0
  %597 = vmatprep.subr.mxu0 0.0
  %598 = vmatpush1.msra.mxu0 0.0
  %599 = vmatprep.subr.mxu0 0.0
  %600 = vmatpush1.msra.mxu0 0.0
  %601 = vmatprep.subr.mxu0 0.0
  %602 = vmatpush1.msra.mxu0 0.0
  %603 = vmatprep.subr.mxu0 0.0
  %604 = vmatpush1.msra.mxu0 0.0
  %605 = vmatprep.subr.mxu0 0.0
  %606 = vmatpush1.msra.mxu0 0.0
  %607 = vmatprep.subr.mxu0 0.0
  %608 = vmatpush1.msra.mxu0 0.0
  %609 = vmatprep.subr.mxu0 0.0
  %610 = vmatpush1.msra.mxu0 0.0
  %611 = vmatprep.subr.mxu0 0.0
  %612 = vmatpush1.msra.mxu0 0.0
  %613 = vmatprep.subr.mxu0 0.0
  %614 = vmatpush1.msra.mxu0 0.0
  %615 = vmatprep.subr.mxu0 0.0
  %616 = vmatpush1.msra.mxu0 0.0
  %617 = vmatprep.subr.mxu0 0.0
  %618 = vmatpush1.msra.mxu0 0.0
  %619 = vmatprep.mubr.f32.mxu0 0.0
  %620 = vmatmul.mubr.f32.gmra.mrb[0].mxu0 %v127
  %v621 = vpop.f32.mrb[0].mxu0
  %v622 = vadd.f32 %v123, %v621
  %v623 = vpop.f32.mrb[0].mxu0
  %624 = vdwg.mxu0
  %v625 = vmul.f32 %v196, 0.5
  %v626 = vmul.f32 %v198, 0.5
  %v627 = vmul.f32 %v267, 0.5
  %v628 = vmul.f32 %v269, 0.5
  %v629 = vmul.f32 %v338, 0.5
  %v630 = vmul.f32 %v340, 0.5
  %v631 = vmul.f32 %v409, 0.5
  %v632 = vmul.f32 %v411, 0.5
  %v633 = vmul.f32 %v480, 0.5
  %v634 = vmul.f32 %v482, 0.5
  %v635 = vmul.f32 %v551, 0.5
  %v636 = vmul.f32 %v553, 0.5
  %v637 = vmul.f32 %v622, 0.5
  %v638 = vtanh.pop %v625
  %v639 = vtanh.pop %v626
  %v640 = vtanh.pop %v627
  %v641 = vtanh.pop %v628
  %v642 = vtanh.pop %v629
  %v643 = vtanh.pop %v630
  %v644 = vtanh.pop %v631
  %v645 = vtanh.pop %v632
  %v646 = vtanh.pop %v633
  %v647 = vtanh.pop %v634
  %v648 = vtanh.pop %v635
  %v649 = vtanh.pop %v636
  %v650 = vtanh.pop %v637
  %v651 = vadd.f32 %v638, 1.0
  %v652 = vadd.f32 %v639, 1.0
  %v653 = vadd.f32 %v640, 1.0
  %v654 = vadd.f32 %v641, 1.0
  %v655 = vadd.f32 %v642, 1.0
  %v656 = vadd.f32 %v643, 1.0
  %v657 = vadd.f32 %v644, 1.0
  %v658 = vadd.f32 %v645, 1.0
  %v659 = vadd.f32 %v646, 1.0
  %v660 = vadd.f32 %v647, 1.0
  %v661 = vadd.f32 %v648, 1.0
  %v662 = vadd.f32 %v649, 1.0
  %v663 = vadd.f32 %v650, 1.0
  %v664 = vmul.f32 %v651, 0.5
  %v665 = vmul.f32 %v652, 0.5
  %v666 = vmul.f32 %v653, 0.5
  %v667 = vmul.f32 %v654, 0.5
  %v668 = vmul.f32 %v655, 0.5
  %v669 = vmul.f32 %v656, 0.5
  %v670 = vmul.f32 %v657, 0.5
  %v671 = vmul.f32 %v658, 0.5
  %v672 = vmul.f32 %v659, 0.5
  %v673 = vmul.f32 %v660, 0.5
  %v674 = vmul.f32 %v661, 0.5
  %v675 = vmul.f32 %v662, 0.5
  %v676 = vmul.f32 %v663, 0.5
  %v689 = vcombine.low %v664, %v665
  %v690 = vcombine.low %v666, %v667
  %v691 = vcombine.low %v668, %v669
  %v692 = vcombine.low %v670, %v671
  %v693 = vcombine.low %v672, %v673
  %v694 = vcombine.low %v674, %v675
  %701 = vst [vmem:[%s3] sm:$0x77] %v689
  %702 = vst [vmem:[%s3 + $0x8] sm:$0x77] %v690
  %703 = vst [vmem:[%s3 + $0x10] sm:$0x77] %v691
  %704 = vst [vmem:[%s3 + $0x18] sm:$0x77] %v692
  %705 = vst [vmem:[%s3 + $0x20] sm:$0x77] %v693
  %706 = vst [vmem:[%s3 + $0x28] sm:$0x77] %v694
  %vm707 = vcmask 256000
  %708 = vst.msk [vmem:[%s3 + $0x30] sm:$0x7] %vm707, %v676
  // Predicated region
  $region14: #{net3_forward.7} parent=0 // pred_check
    _
  $region15: #{net3_forward.7} parent=0 // pred_check_branch
    %710 = sbr.rel (0) target = $region17
  $region16: #{net3_forward.7} parent=0 // pred_region
    _
  $region17: #{net3_forward.7} parent=0 // pred_fallthru
    _
  // Predicated region
  $region18: #{net3_forward.7} parent=0 // pred_check
    _
  $region19: #{net3_forward.7} parent=0 // pred_check_branch
    %712 = sbr.rel (0) target = $region21
  $region20: #{net3_forward.7} parent=0 // pred_region
    _
  $region21: #{net3_forward.7} parent=0 // pred_fallthru
    _

</llo_original>
